<compile_context>
chip_gen: v5e
topology: v5e:2x2
jax: 0.10.0
libtpu: 0.0.40
codegen_flags: <defaults>
</compile_context>

<pallas_src>
import functools
import math

import jax
import jax.numpy as jnp
from jax import lax
from jax.experimental import pallas as pl
from jax.experimental.pallas import tpu as pltpu

DIM = 64  # ScaledDotProductAttention hard-codes dim=64, so Encoder(dim=64).

VMEM_LIMIT_BYTES = 48 * 1024 * 1024   # > v5e scoped default (16 MiB), < v7x physical (64 MiB/TC)
MAX_BLOCK_BYTES = 16 * 1024 * 1024    # cap so 2x-buffered x + scratch always fits the limit


def _gelu_exact(z):
    # PyTorch nn.GELU() default = exact erf GELU.  erf via Abramowitz-Stegun
    # 7.1.26 (|abs err| < 1.5e-7, f32-accurate) since it only needs exp.
    u = z * jnp.float32(0.7071067811865476)
    a = jnp.abs(u)
    t = 1.0 / (1.0 + jnp.float32(0.3275911) * a)
    poly = t * (jnp.float32(0.254829592)
                + t * (jnp.float32(-0.284496736)
                       + t * (jnp.float32(1.421413741)
                              + t * (jnp.float32(-1.453152027)
                                     + t * jnp.float32(1.061405429)))))
    erf_abs = 1.0 - poly * jnp.exp(-a * a)
    erf_u = jnp.where(u >= 0, erf_abs, -erf_abs)
    return 0.5 * z * (1.0 + erf_u)


def encoder_kernel(x_ref, wqkv_ref, bqkv_ref, w1_ref, w2_ref, vec_ref,
                   o_ref, acc_ref, *, hw, n_sub):
    """Grid = (support n [parallel], spatial chunk c [arbitrary/reduction])."""
    c = pl.program_id(1)

    # ---- streamed GAP: accumulate this chunk into the lane-shaped accumulator ----
    @pl.when(c == 0)
    def _():
        acc_ref[...] = jnp.zeros_like(acc_ref)

    # Accumulate 128-lane slices of the bf16 block into a vreg-resident f32 partial:
    # hot loop stays on vld + VALU slots (no per-step XLU reduce, no full-block f32
    # intermediate), then a single RMW of the accumulator per grid step.
    def gap_step(j, partial):
        off = pl.multiple_of(j * 128, 128)
        blk = x_ref[0, :, :, pl.ds(off, 128)]                 # (B, DIM, 128) bf16
        return partial + blk.astype(jnp.float32)

    partial = lax.fori_loop(0, n_sub, gap_step,
                            jnp.zeros(acc_ref.shape, jnp.float32),
                            unroll=min(4, n_sub))
    acc_ref[...] += partial

    # ---- epilogue on the last chunk: attention + LN + FFN + LN + batch mean ----
    @pl.when(c == pl.num_programs(1) - 1)
    def _():
        # single cross-lane reduce per support; divide by the TRUE hw (zero-padding exact)
        s = jnp.sum(acc_ref[...], axis=-1) * jnp.float32(1.0 / hw)     # (B, DIM)

        vec = vec_ref[...]                                             # (8, DIM) slab
        b1, b2 = vec[0:1, :], vec[1:2, :]
        gamma, beta = vec[2:3, :], vec[3:4, :]

        # fused q/k/v projection: single (DIM, 3*DIM) matmul
        qkv = jnp.dot(s, wqkv_ref[...],
                      preferred_element_type=jnp.float32) + bqkv_ref[...]
        q = qkv[:, 0:DIM]
        k = qkv[:, DIM:2 * DIM]
        v = qkv[:, 2 * DIM:3 * DIM]

        # per-sample outer-product attention, softmax over last axis
        scale = jnp.float32(1.0) / jnp.sqrt(jnp.float32(DIM))
        scores = q[:, :, None] * k[:, None, :] * scale                 # (B, DIM, DIM)
        scores = scores - jnp.max(scores, axis=-1, keepdims=True)
        p = jnp.exp(scores)
        p = p * pl.reciprocal(jnp.sum(p, axis=-1, keepdims=True), approx=False)
        attn = jnp.sum(p * v[:, None, :], axis=-1)                     # (B, DIM)

        s = attn + s                                                   # residual

        def layernorm(z):  # shared LayerNorm params, eps=1e-5, biased variance
            mu = jnp.mean(z, axis=-1, keepdims=True)
            var = jnp.mean((z - mu) * (z - mu), axis=-1, keepdims=True)
            return (z - mu) * lax.rsqrt(var + jnp.float32(1e-5)) * gamma + beta

        s = layernorm(s)

        # FFN: Linear -> GELU -> Linear -> GELU, residual
        h = jnp.dot(s, w1_ref[...], preferred_element_type=jnp.float32) + b1
        h = _gelu_exact(h)
        h = jnp.dot(h, w2_ref[...], preferred_element_type=jnp.float32) + b2
        h = _gelu_exact(h)
        s = layernorm(h + s)

        o_ref[0] = jnp.mean(s, axis=0, keepdims=True)                  # (1, DIM)


def _plan_chunks(hw, batch, itemsize, target_block_bytes):
    """Lane-aligned chunks of ~target_block_bytes each; hw will be zero-padded up to
    chunk * n_chunks (exact: the kernel's mean divides by the true hw)."""
    target_block_bytes = min(target_block_bytes, MAX_BLOCK_BYTES)
    rows = batch * DIM
    hw128 = math.ceil(hw / 128) * 128
    max_chunk = max(128, (target_block_bytes // (rows * itemsize)) // 128 * 128)
    n_chunks = max(1, math.ceil(hw128 / max_chunk))
    chunk = math.ceil(hw128 / (n_chunks * 128)) * 128
    hw_pad = chunk * n_chunks
    return chunk, n_chunks, hw_pad


@functools.partial(jax.jit, static_argnames=("chunk", "n_chunks"))
def _encode_stacked(x, params, *, chunk, n_chunks):
    """x: (N, B, C=DIM, HW) float32  ->  (N, 1, DIM) float32."""
    N, B, C, HW = x.shape
    assert C == DIM
    hw_pad = chunk * n_chunks

    # stream x as bf16 (cast fuses with the stack copy); zero-pad HW to chunk*n_chunks
    xs = x.astype(jnp.bfloat16)
    if hw_pad != HW:
        xs = jnp.pad(xs, ((0, 0), (0, 0), (0, 0), (0, hw_pad - HW)))

    # consolidate 13 tiny parameter tensors into 5 VMEM-resident inputs
    wqkv = jnp.concatenate([params["wq"], params["wk"], params["wv"]], axis=1)  # (DIM, 3*DIM)
    bqkv = jnp.concatenate([params["bq"], params["bk"], params["bv"]], axis=1)  # (1, 3*DIM)
    vec = jnp.concatenate([params["b1"], params["b2"],
                           params["gamma"], params["beta"],
                           jnp.zeros((4, DIM), jnp.float32)], axis=0)           # (8, DIM)
    w1, w2 = params["w1"], params["w2"]

    const = lambda n, c: (0, 0)   # parameters: same block every grid step (DMA'd once)
    return pl.pallas_call(
        functools.partial(encoder_kernel, hw=HW, n_sub=chunk // 128),
        out_shape=jax.ShapeDtypeStruct((N, 1, DIM), jnp.float32),
        grid_spec=pltpu.PrefetchScalarGridSpec(
            num_scalar_prefetch=0,
            grid=(N, n_chunks),
            in_specs=[
                pl.BlockSpec((1, B, DIM, chunk), lambda n, c: (n, 0, 0, c)),
                pl.BlockSpec((DIM, 3 * DIM), const),
                pl.BlockSpec((1, 3 * DIM), const),
                pl.BlockSpec((DIM, DIM), const),
                pl.BlockSpec((DIM, DIM), const),
                pl.BlockSpec((8, DIM), const),
            ],
            out_specs=pl.BlockSpec((1, 1, DIM), lambda n, c: (n, 0, 0)),
            scratch_shapes=[pltpu.VMEM((B, DIM, 128), jnp.float32)],
        ),
        compiler_params=pltpu.CompilerParams(
            dimension_semantics=("parallel", "arbitrary"),
            vmem_limit_bytes=VMEM_LIMIT_BYTES),
    )(xs, wqkv, bqkv, w1, w2, vec)


def encoder_forward(support_list, params, target_block_bytes=8 * 1024 * 1024):
    """Mirrors Encoder.forward: returns a list of (1, dim) encodings."""
    # Fused kernel requires all Support tensors to share a shape (true for typical use).
    shapes = {tuple(s.shape) for s in support_list}
    assert len(shapes) == 1, "fused Pallas kernel expects equal-shaped Support tensors"
    B, C, H, W = support_list[0].shape
    assert C == DIM
    hw = H * W
    chunk, n_chunks, _ = _plan_chunks(hw, B, 2, target_block_bytes)  # itemsize=2 (bf16 stream)
    x = jnp.stack([s.reshape(B, C, hw) for s in support_list], axis=0)   # (N, B, C, HW) f32
    out = _encode_stacked(x, params, chunk=chunk, n_chunks=n_chunks)     # (N, 1, DIM)
    return [out[i] for i in range(len(support_list))]


def init_params(key, dim=DIM):
    ks = jax.random.split(key, 10)

    def linear(kw, kb, fan_in, fan_out):
        bound = 1.0 / (fan_in ** 0.5)
        # stored as (in, out) so the kernel computes x @ W  (== PyTorch x @ W_pt.T)
        w = jax.random.uniform(kw, (fan_in, fan_out), jnp.float32, -bound, bound)
        b = jax.random.uniform(kb, (1, fan_out), jnp.float32, -bound, bound)
        return w, b

    wq, bq = linear(ks[0], ks[1], dim, dim)
    wk, bk = linear(ks[2], ks[3], dim, dim)
    wv, bv = linear(ks[4], ks[5], dim, dim)
    w1, b1 = linear(ks[6], ks[7], dim, dim)
    w2, b2 = linear(ks[8], ks[9], dim, dim)
    return dict(
        wq=wq, bq=bq, wk=wk, bk=bk, wv=wv, bv=bv,
        gamma=jnp.ones((1, dim), jnp.float32),   # LayerNorm default init
        beta=jnp.zeros((1, dim), jnp.float32),
        w1=w1, b1=b1, w2=w2, b2=b2,
    )


def _reference_one(x_nchw, p):
    """Pure-JAX reference mirroring the PyTorch forward exactly."""
    s = jnp.mean(x_nchw, axis=(2, 3))                                   # GAP
    q = s @ p["wq"] + p["bq"]
    k = s @ p["wk"] + p["bk"]
    v = s @ p["wv"] + p["bv"]
    scores = (q[:, :, None] * k[:, None, :]) / jnp.sqrt(jnp.float32(DIM))
    attn_w = jax.nn.softmax(scores, axis=-1)
    attn = jnp.einsum("bij,bj->bi", attn_w, v)
    s = attn + s

    def ln(z):
        mu = jnp.mean(z, axis=-1, keepdims=True)
        var = jnp.mean((z - mu) ** 2, axis=-1, keepdims=True)
        return (z - mu) / jnp.sqrt(var + 1e-5) * p["gamma"] + p["beta"]

    s = ln(s)
    h = jax.nn.gelu(s @ p["w1"] + p["b1"], approximate=False)
    h = jax.nn.gelu(h @ p["w2"] + p["b2"], approximate=False)
    s = ln(h + s)
    return jnp.mean(s, axis=0, keepdims=True)


if __name__ == "__main__":
    key = jax.random.PRNGKey(0)
    kp, kx = jax.random.split(key)
    params = init_params(kp)

    # Small example "Support" list: 3 tensors of shape (B=2, C=64, H=24, W=24), NCHW.
    # H*W = 576 is NOT a multiple of 128, so this exercises the zero-padding path;
    # target_block_bytes=64 KiB forces chunk=256 over 3 chunks, exercising the streamed
    # accumulation + last-chunk epilogue (production default is 8 MiB blocks).
    n_support, B, H, W = 3, 2, 24, 24
    xkeys = jax.random.split(kx, n_support)
    support = [jax.random.normal(k, (B, DIM, H, W), jnp.float32) for k in xkeys]

    encoded = encoder_forward(support, params, target_block_bytes=64 * 1024)
    encoded = [jax.block_until_ready(e) for e in encoded]

    # sanity check vs pure-JAX reference, fed the same bf16-quantized input the kernel streams
    for s_in, e_out in zip(support, encoded):
        s_q = s_in.astype(jnp.bfloat16).astype(jnp.float32)
        ref = _reference_one(s_q, params)
        assert e_out.shape == (1, DIM)
        err = float(jnp.max(jnp.abs(e_out - ref)))
        assert jnp.allclose(e_out, ref, atol=5e-4, rtol=5e-4), err

    print("KERNEL_OK")
</pallas_src>

<mosaic_0001>
module attributes {stable_mosaic.version = 11 : i64} {
  func.func @encoder_kernel(%arg0: i32, %arg1: i32, %arg2: memref<1x2x64x256xbf16, #tpu.memory_space<vmem>>, %arg3: memref<64x192xf32, #tpu.memory_space<vmem>>, %arg4: memref<1x192xf32, #tpu.memory_space<vmem>>, %arg5: memref<64x64xf32, #tpu.memory_space<vmem>>, %arg6: memref<64x64xf32, #tpu.memory_space<vmem>>, %arg7: memref<8x64xf32, #tpu.memory_space<vmem>>, %arg8: memref<1x1x64xf32, #tpu.memory_space<vmem>>, %arg9: memref<2x64x128xf32, #tpu.memory_space<vmem>>) attributes {dimension_semantics = [#tpu.dimension_semantics<parallel>, #tpu.dimension_semantics<arbitrary>], iteration_bounds = array<i64: 3, 3>, scalar_prefetch = 0 : i64, scratch_operands = 1 : i64, tpu.core_type = #tpu.core_type<tc>, window_params = [{transform_indices = @transform_0, window_bounds = array<i64: 1, 2, 64, 256>}, {pipeline_mode = #tpu.pipeline_mode<synchronous>, transform_indices = @transform_1, window_bounds = array<i64: 64, 192>}, {pipeline_mode = #tpu.pipeline_mode<synchronous>, transform_indices = @transform_2, window_bounds = array<i64: 1, 192>}, {pipeline_mode = #tpu.pipeline_mode<synchronous>, transform_indices = @transform_3, window_bounds = array<i64: 64, 64>}, {pipeline_mode = #tpu.pipeline_mode<synchronous>, transform_indices = @transform_4, window_bounds = array<i64: 64, 64>}, {pipeline_mode = #tpu.pipeline_mode<synchronous>, transform_indices = @transform_5, window_bounds = array<i64: 8, 64>}, {transform_indices = @transform_6, window_bounds = array<i64: 1, 1, 64>}]} {
    %c0_i32 = arith.constant 0 : i32
    %0 = arith.cmpi eq, %arg1, %c0_i32 : i32
    %1 = arith.extui %0 : i1 to i32
    %c0_i32_0 = arith.constant 0 : i32
    %2 = arith.cmpi ne, %1, %c0_i32_0 : i32
    scf.if %2 {
      %cst_16 = arith.constant 0.000000e+00 : f32
      %24 = vector.broadcast %cst_16 : f32 to vector<2x64x128xf32>
      %c0_17 = arith.constant 0 : index
      %c0_18 = arith.constant 0 : index
      %c0_19 = arith.constant 0 : index
      %25 = vector.load %arg9[%c0_17, %c0_18, %c0_19] : memref<2x64x128xf32, #tpu.memory_space<vmem>>, vector<2x64x128xf32>
      tpu.vector_store %arg9[%c0_17, %c0_18, %c0_19], %24 {strides = array<i32>} : memref<2x64x128xf32, #tpu.memory_space<vmem>>, vector<2x64x128xf32>,
    } else {
    }
    %cst = arith.constant 0.000000e+00 : f32
    %3 = vector.broadcast %cst : f32 to vector<2x64x128xf32>
    %c0_i32_1 = arith.constant 0 : i32
    %c128_i32 = arith.constant 128 : i32
    %4 = arith.muli %c0_i32_1, %c128_i32 : i32
    %5 = tpu.assume_multiple %4, 128 : i32
    %c0 = arith.constant 0 : index
    %c0_2 = arith.constant 0 : index
    %c0_3 = arith.constant 0 : index
    %6 = arith.index_cast %5 : i32 to index
    %7 = vector.load %arg2[%c0, %c0_2, %c0_3, %6] : memref<1x2x64x256xbf16, #tpu.memory_space<vmem>>, vector<1x2x64x128xbf16>
    %8 = vector.shape_cast %7 : vector<1x2x64x128xbf16> to vector<2x64x128xbf16>
    %9 = arith.extf %8 : vector<2x64x128xbf16> to vector<2x64x128xf32>
    %10 = arith.addf %3, %9 : vector<2x64x128xf32>
    %c1_i32 = arith.constant 1 : i32
    %c128_i32_4 = arith.constant 128 : i32
    %11 = arith.muli %c1_i32, %c128_i32_4 : i32
    %12 = tpu.assume_multiple %11, 128 : i32
    %c0_5 = arith.constant 0 : index
    %c0_6 = arith.constant 0 : index
    %c0_7 = arith.constant 0 : index
    %13 = arith.index_cast %12 : i32 to index
    %14 = vector.load %arg2[%c0_5, %c0_6, %c0_7, %13] : memref<1x2x64x256xbf16, #tpu.memory_space<vmem>>, vector<1x2x64x128xbf16>
    %15 = vector.shape_cast %14 : vector<1x2x64x128xbf16> to vector<2x64x128xbf16>
    %16 = arith.extf %15 : vector<2x64x128xbf16> to vector<2x64x128xf32>
    %17 = arith.addf %10, %16 : vector<2x64x128xf32>
    %c2_i32 = arith.constant 2 : i32
    %c0_8 = arith.constant 0 : index
    %c0_9 = arith.constant 0 : index
    %c0_10 = arith.constant 0 : index
    %18 = vector.load %arg9[%c0_8, %c0_9, %c0_10] : memref<2x64x128xf32, #tpu.memory_space<vmem>>, vector<2x64x128xf32>
    %19 = arith.addf %18, %17 : vector<2x64x128xf32>
    %c0_11 = arith.constant 0 : index
    %c0_12 = arith.constant 0 : index
    %c0_13 = arith.constant 0 : index
    %20 = vector.load %arg9[%c0_11, %c0_12, %c0_13] : memref<2x64x128xf32, #tpu.memory_space<vmem>>, vector<2x64x128xf32>
    tpu.vector_store %arg9[%c0_11, %c0_12, %c0_13], %19 {strides = array<i32>} : memref<2x64x128xf32, #tpu.memory_space<vmem>>, vector<2x64x128xf32>,
    %c2_i32_14 = arith.constant 2 : i32
    %21 = arith.cmpi eq, %arg1, %c2_i32_14 : i32
    %22 = arith.extui %21 : i1 to i32
    %c0_i32_15 = arith.constant 0 : i32
    %23 = arith.cmpi ne, %22, %c0_i32_15 : i32
    scf.if %23 {
      %c0_16 = arith.constant 0 : index
      %c0_17 = arith.constant 0 : index
      %c0_18 = arith.constant 0 : index
      %24 = vector.load %arg9[%c0_16, %c0_17, %c0_18] : memref<2x64x128xf32, #tpu.memory_space<vmem>>, vector<2x64x128xf32>
      %cst_19 = arith.constant dense<0.000000e+00> : vector<2x64xf32>
      %25 = vector.multi_reduction <add>, %24, %cst_19 [2] : vector<2x64x128xf32> to vector<2x64xf32>
      %cst_20 = arith.constant 0.00173611112 : f32
      %26 = vector.broadcast %cst_20 : f32 to vector<2x64xf32>
      %27 = arith.mulf %25, %26 : vector<2x64xf32>
      %c0_21 = arith.constant 0 : index
      %c0_22 = arith.constant 0 : index
      %28 = vector.load %arg7[%c0_21, %c0_22] : memref<8x64xf32, #tpu.memory_space<vmem>>, vector<8x64xf32>
      %29 = vector.extract_strided_slice %28 {offsets = [0, 0], sizes = [1, 64], strides = [1, 1]} : vector<8x64xf32> to vector<1x64xf32>
      %30 = vector.extract_strided_slice %28 {offsets = [1, 0], sizes = [1, 64], strides = [1, 1]} : vector<8x64xf32> to vector<1x64xf32>
      %31 = vector.extract_strided_slice %28 {offsets = [2, 0], sizes = [1, 64], strides = [1, 1]} : vector<8x64xf32> to vector<1x64xf32>
      %32 = vector.extract_strided_slice %28 {offsets = [3, 0], sizes = [1, 64], strides = [1, 1]} : vector<8x64xf32> to vector<1x64xf32>
      %c0_23 = arith.constant 0 : index
      %c0_24 = arith.constant 0 : index
      %33 = vector.load %arg3[%c0_23, %c0_24] : memref<64x192xf32, #tpu.memory_space<vmem>>, vector<64x192xf32>
      %cst_25 = arith.constant dense<0.000000e+00> : vector<2x192xf32>
      %34 = tpu.matmul %27, %33, %cst_25 {dimension_numbers = #tpu.dot_dimension_numbers<[1], [0], [0], [1], [0, 0, 1, 1], [], []>} : vector<2x64xf32>, vector<64x192xf32>, vector<2x192xf32> -> vector<2x192xf32>
      %c0_26 = arith.constant 0 : index
      %c0_27 = arith.constant 0 : index
      %35 = vector.load %arg4[%c0_26, %c0_27] : memref<1x192xf32, #tpu.memory_space<vmem>>, vector<1x192xf32>
      %36 = vector.broadcast %35 : vector<1x192xf32> to vector<2x192xf32>
      %37 = arith.addf %34, %36 : vector<2x192xf32>
      %38 = vector.extract_strided_slice %37 {offsets = [0, 0], sizes = [2, 64], strides = [1, 1]} : vector<2x192xf32> to vector<2x64xf32>
      %39 = vector.extract_strided_slice %37 {offsets = [0, 64], sizes = [2, 64], strides = [1, 1]} : vector<2x192xf32> to vector<2x64xf32>
      %40 = vector.extract_strided_slice %37 {offsets = [0, 128], sizes = [2, 64], strides = [1, 1]} : vector<2x192xf32> to vector<2x64xf32>
      %cst_28 = arith.constant 6.400000e+01 : f32
      %41 = math.sqrt %cst_28 : f32
      %cst_29 = arith.constant 1.000000e+00 : f32
      %42 = arith.divf %cst_29, %41 : f32
      %43 = vector.shape_cast %38 : vector<2x64xf32> to vector<2x64x1xf32>
      %44 = vector.shape_cast %39 : vector<2x64xf32> to vector<2x1x64xf32>
      %45 = vector.broadcast %43 : vector<2x64x1xf32> to vector<2x64x64xf32>
      %46 = vector.broadcast %44 : vector<2x1x64xf32> to vector<2x64x64xf32>
      %47 = arith.mulf %45, %46 : vector<2x64x64xf32>
      %48 = vector.broadcast %42 : f32 to vector<2x64x64xf32>
      %49 = arith.mulf %47, %48 : vector<2x64x64xf32>
      %cst_30 = arith.constant dense<0xFF800000> : vector<2x64xf32>
      %50 = vector.multi_reduction <maximumf>, %49, %cst_30 [2] : vector<2x64x64xf32> to vector<2x64xf32>
      %51 = vector.shape_cast %50 : vector<2x64xf32> to vector<2x64x1xf32>
      %52 = vector.broadcast %51 : vector<2x64x1xf32> to vector<2x64x64xf32>
      %53 = arith.subf %49, %52 : vector<2x64x64xf32>
      %54 = math.exp %53 : vector<2x64x64xf32>
      %cst_31 = arith.constant dense<0.000000e+00> : vector<2x64xf32>
      %55 = vector.multi_reduction <add>, %54, %cst_31 [2] : vector<2x64x64xf32> to vector<2x64xf32>
      %56 = vector.shape_cast %55 : vector<2x64xf32> to vector<2x64x1xf32>
      %57 = tpu.reciprocal %56 : vector<2x64x1xf32> -> vector<2x64x1xf32>
      %58 = vector.broadcast %57 : vector<2x64x1xf32> to vector<2x64x64xf32>
      %59 = arith.mulf %54, %58 : vector<2x64x64xf32>
      %60 = vector.shape_cast %40 : vector<2x64xf32> to vector<2x1x64xf32>
      %61 = vector.broadcast %60 : vector<2x1x64xf32> to vector<2x64x64xf32>
      %62 = arith.mulf %59, %61 : vector<2x64x64xf32>
      %cst_32 = arith.constant dense<0.000000e+00> : vector<2x64xf32>
      %63 = vector.multi_reduction <add>, %62, %cst_32 [2] : vector<2x64x64xf32> to vector<2x64xf32>
      %64 = arith.addf %63, %27 : vector<2x64xf32>
      %cst_33 = arith.constant dense<0.000000e+00> : vector<2xf32>
      %65 = vector.multi_reduction <add>, %64, %cst_33 [1] : vector<2x64xf32> to vector<2xf32>
      %66 = vector.shape_cast %65 : vector<2xf32> to vector<2x1xf32>
      %cst_34 = arith.constant 6.400000e+01 : f32
      %67 = vector.broadcast %cst_34 : f32 to vector<2x1xf32>
      %68 = arith.divf %66, %67 : vector<2x1xf32>
      %69 = vector.broadcast %68 : vector<2x1xf32> to vector<2x64xf32>
      %70 = arith.subf %64, %69 : vector<2x64xf32>
      %71 = vector.broadcast %68 : vector<2x1xf32> to vector<2x64xf32>
      %72 = arith.subf %64, %71 : vector<2x64xf32>
      %73 = arith.mulf %70, %72 : vector<2x64xf32>
      %cst_35 = arith.constant dense<0.000000e+00> : vector<2xf32>
      %74 = vector.multi_reduction <add>, %73, %cst_35 [1] : vector<2x64xf32> to vector<2xf32>
      %75 = vector.shape_cast %74 : vector<2xf32> to vector<2x1xf32>
      %cst_36 = arith.constant 6.400000e+01 : f32
      %76 = vector.broadcast %cst_36 : f32 to vector<2x1xf32>
      %77 = arith.divf %75, %76 : vector<2x1xf32>
      %78 = vector.broadcast %68 : vector<2x1xf32> to vector<2x64xf32>
      %79 = arith.subf %64, %78 : vector<2x64xf32>
      %cst_37 = arith.constant 9.99999974E-6 : f32
      %80 = vector.broadcast %cst_37 : f32 to vector<2x1xf32>
      %81 = arith.addf %77, %80 : vector<2x1xf32>
      %82 = math.rsqrt %81 : vector<2x1xf32>
      %83 = vector.broadcast %82 : vector<2x1xf32> to vector<2x64xf32>
      %84 = arith.mulf %79, %83 : vector<2x64xf32>
      %85 = vector.broadcast %31 : vector<1x64xf32> to vector<2x64xf32>
      %86 = arith.mulf %84, %85 : vector<2x64xf32>
      %87 = vector.broadcast %32 : vector<1x64xf32> to vector<2x64xf32>
      %88 = arith.addf %86, %87 : vector<2x64xf32>
      %c0_38 = arith.constant 0 : index
      %c0_39 = arith.constant 0 : index
      %89 = vector.load %arg5[%c0_38, %c0_39] : memref<64x64xf32, #tpu.memory_space<vmem>>, vector<64x64xf32>
      %cst_40 = arith.constant dense<0.000000e+00> : vector<2x64xf32>
      %90 = tpu.matmul %88, %89, %cst_40 {dimension_numbers = #tpu.dot_dimension_numbers<[1], [0], [0], [1], [0, 0, 1, 1], [], []>} : vector<2x64xf32>, vector<64x64xf32>, vector<2x64xf32> -> vector<2x64xf32>
      %91 = vector.broadcast %29 : vector<1x64xf32> to vector<2x64xf32>
      %92 = arith.addf %90, %91 : vector<2x64xf32>
      %cst_41 = arith.constant 0.707106769 : f32
      %93 = vector.broadcast %cst_41 : f32 to vector<2x64xf32>
      %94 = arith.mulf %92, %93 : vector<2x64xf32>
      %95 = math.absf %94 : vector<2x64xf32>
      %cst_42 = arith.constant 0.327591091 : f32
      %96 = vector.broadcast %cst_42 : f32 to vector<2x64xf32>
      %97 = arith.mulf %96, %95 : vector<2x64xf32>
      %cst_43 = arith.constant 1.000000e+00 : f32
      %98 = vector.broadcast %cst_43 : f32 to vector<2x64xf32>
      %99 = arith.addf %98, %97 : vector<2x64xf32>
      %cst_44 = arith.constant 1.000000e+00 : f32
      %100 = vector.broadcast %cst_44 : f32 to vector<2x64xf32>
      %101 = arith.divf %100, %99 : vector<2x64xf32>
      %cst_45 = arith.constant 1.06140542 : f32
      %102 = vector.broadcast %cst_45 : f32 to vector<2x64xf32>
      %103 = arith.mulf %101, %102 : vector<2x64xf32>
      %cst_46 = arith.constant -1.45315206 : f32
      %104 = vector.broadcast %cst_46 : f32 to vector<2x64xf32>
      %105 = arith.addf %104, %103 : vector<2x64xf32>
      %106 = arith.mulf %101, %105 : vector<2x64xf32>
      %cst_47 = arith.constant 1.42141378 : f32
      %107 = vector.broadcast %cst_47 : f32 to vector<2x64xf32>
      %108 = arith.addf %107, %106 : vector<2x64xf32>
      %109 = arith.mulf %101, %108 : vector<2x64xf32>
      %cst_48 = arith.constant -0.284496725 : f32
      %110 = vector.broadcast %cst_48 : f32 to vector<2x64xf32>
      %111 = arith.addf %110, %109 : vector<2x64xf32>
      %112 = arith.mulf %101, %111 : vector<2x64xf32>
      %cst_49 = arith.constant 0.254829586 : f32
      %113 = vector.broadcast %cst_49 : f32 to vector<2x64xf32>
      %114 = arith.addf %113, %112 : vector<2x64xf32>
      %115 = arith.mulf %101, %114 : vector<2x64xf32>
      %cst_50 = arith.constant 0.000000e+00 : f32
      %116 = vector.broadcast %cst_50 : f32 to vector<2x64xf32>
      %117 = arith.subf %116, %95 : vector<2x64xf32>
      %118 = arith.mulf %117, %95 : vector<2x64xf32>
      %119 = math.exp %118 : vector<2x64xf32>
      %120 = arith.mulf %115, %119 : vector<2x64xf32>
      %cst_51 = arith.constant 1.000000e+00 : f32
      %121 = vector.broadcast %cst_51 : f32 to vector<2x64xf32>
      %122 = arith.subf %121, %120 : vector<2x64xf32>
      %cst_52 = arith.constant 0.000000e+00 : f32
      %123 = vector.broadcast %cst_52 : f32 to vector<2x64xf32>
      %124 = arith.cmpf oge, %94, %123 : vector<2x64xf32>
      %cst_53 = arith.constant 0.000000e+00 : f32
      %125 = vector.broadcast %cst_53 : f32 to vector<2x64xf32>
      %126 = arith.subf %125, %122 : vector<2x64xf32>
      %127 = arith.select %124, %122, %126 : vector<2x64xi1>, vector<2x64xf32>
      %cst_54 = arith.constant 5.000000e-01 : f32
      %128 = vector.broadcast %cst_54 : f32 to vector<2x64xf32>
      %129 = arith.mulf %128, %92 : vector<2x64xf32>
      %cst_55 = arith.constant 1.000000e+00 : f32
      %130 = vector.broadcast %cst_55 : f32 to vector<2x64xf32>
      %131 = arith.addf %130, %127 : vector<2x64xf32>
      %132 = arith.mulf %129, %131 : vector<2x64xf32>
      %c0_56 = arith.constant 0 : index
      %c0_57 = arith.constant 0 : index
      %133 = vector.load %arg6[%c0_56, %c0_57] : memref<64x64xf32, #tpu.memory_space<vmem>>, vector<64x64xf32>
      %cst_58 = arith.constant dense<0.000000e+00> : vector<2x64xf32>
      %134 = tpu.matmul %132, %133, %cst_58 {dimension_numbers = #tpu.dot_dimension_numbers<[1], [0], [0], [1], [0, 0, 1, 1], [], []>} : vector<2x64xf32>, vector<64x64xf32>, vector<2x64xf32> -> vector<2x64xf32>
      %135 = vector.broadcast %30 : vector<1x64xf32> to vector<2x64xf32>
      %136 = arith.addf %134, %135 : vector<2x64xf32>
      %cst_59 = arith.constant 0.707106769 : f32
      %137 = vector.broadcast %cst_59 : f32 to vector<2x64xf32>
      %138 = arith.mulf %136, %137 : vector<2x64xf32>
      %139 = math.absf %138 : vector<2x64xf32>
      %cst_60 = arith.constant 0.327591091 : f32
      %140 = vector.broadcast %cst_60 : f32 to vector<2x64xf32>
      %141 = arith.mulf %140, %139 : vector<2x64xf32>
      %cst_61 = arith.constant 1.000000e+00 : f32
      %142 = vector.broadcast %cst_61 : f32 to vector<2x64xf32>
      %143 = arith.addf %142, %141 : vector<2x64xf32>
      %cst_62 = arith.constant 1.000000e+00 : f32
      %144 = vector.broadcast %cst_62 : f32 to vector<2x64xf32>
      %145 = arith.divf %144, %143 : vector<2x64xf32>
      %cst_63 = arith.constant 1.06140542 : f32
      %146 = vector.broadcast %cst_63 : f32 to vector<2x64xf32>
      %147 = arith.mulf %145, %146 : vector<2x64xf32>
      %cst_64 = arith.constant -1.45315206 : f32
      %148 = vector.broadcast %cst_64 : f32 to vector<2x64xf32>
      %149 = arith.addf %148, %147 : vector<2x64xf32>
      %150 = arith.mulf %145, %149 : vector<2x64xf32>
      %cst_65 = arith.constant 1.42141378 : f32
      %151 = vector.broadcast %cst_65 : f32 to vector<2x64xf32>
      %152 = arith.addf %151, %150 : vector<2x64xf32>
      %153 = arith.mulf %145, %152 : vector<2x64xf32>
      %cst_66 = arith.constant -0.284496725 : f32
      %154 = vector.broadcast %cst_66 : f32 to vector<2x64xf32>
      %155 = arith.addf %154, %153 : vector<2x64xf32>
      %156 = arith.mulf %145, %155 : vector<2x64xf32>
      %cst_67 = arith.constant 0.254829586 : f32
      %157 = vector.broadcast %cst_67 : f32 to vector<2x64xf32>
      %158 = arith.addf %157, %156 : vector<2x64xf32>
      %159 = arith.mulf %145, %158 : vector<2x64xf32>
      %cst_68 = arith.constant 0.000000e+00 : f32
      %160 = vector.broadcast %cst_68 : f32 to vector<2x64xf32>
      %161 = arith.subf %160, %139 : vector<2x64xf32>
      %162 = arith.mulf %161, %139 : vector<2x64xf32>
      %163 = math.exp %162 : vector<2x64xf32>
      %164 = arith.mulf %159, %163 : vector<2x64xf32>
      %cst_69 = arith.constant 1.000000e+00 : f32
      %165 = vector.broadcast %cst_69 : f32 to vector<2x64xf32>
      %166 = arith.subf %165, %164 : vector<2x64xf32>
      %cst_70 = arith.constant 0.000000e+00 : f32
      %167 = vector.broadcast %cst_70 : f32 to vector<2x64xf32>
      %168 = arith.cmpf oge, %138, %167 : vector<2x64xf32>
      %cst_71 = arith.constant 0.000000e+00 : f32
      %169 = vector.broadcast %cst_71 : f32 to vector<2x64xf32>
      %170 = arith.subf %169, %166 : vector<2x64xf32>
      %171 = arith.select %168, %166, %170 : vector<2x64xi1>, vector<2x64xf32>
      %cst_72 = arith.constant 5.000000e-01 : f32
      %172 = vector.broadcast %cst_72 : f32 to vector<2x64xf32>
      %173 = arith.mulf %172, %136 : vector<2x64xf32>
      %cst_73 = arith.constant 1.000000e+00 : f32
      %174 = vector.broadcast %cst_73 : f32 to vector<2x64xf32>
      %175 = arith.addf %174, %171 : vector<2x64xf32>
      %176 = arith.mulf %173, %175 : vector<2x64xf32>
      %177 = arith.addf %176, %88 : vector<2x64xf32>
      %cst_74 = arith.constant dense<0.000000e+00> : vector<2xf32>
      %178 = vector.multi_reduction <add>, %177, %cst_74 [1] : vector<2x64xf32> to vector<2xf32>
      %179 = vector.shape_cast %178 : vector<2xf32> to vector<2x1xf32>
      %cst_75 = arith.constant 6.400000e+01 : f32
      %180 = vector.broadcast %cst_75 : f32 to vector<2x1xf32>
      %181 = arith.divf %179, %180 : vector<2x1xf32>
      %182 = vector.broadcast %181 : vector<2x1xf32> to vector<2x64xf32>
      %183 = arith.subf %177, %182 : vector<2x64xf32>
      %184 = vector.broadcast %181 : vector<2x1xf32> to vector<2x64xf32>
      %185 = arith.subf %177, %184 : vector<2x64xf32>
      %186 = arith.mulf %183, %185 : vector<2x64xf32>
      %cst_76 = arith.constant dense<0.000000e+00> : vector<2xf32>
      %187 = vector.multi_reduction <add>, %186, %cst_76 [1] : vector<2x64xf32> to vector<2xf32>
      %188 = vector.shape_cast %187 : vector<2xf32> to vector<2x1xf32>
      %cst_77 = arith.constant 6.400000e+01 : f32
      %189 = vector.broadcast %cst_77 : f32 to vector<2x1xf32>
      %190 = arith.divf %188, %189 : vector<2x1xf32>
      %191 = vector.broadcast %181 : vector<2x1xf32> to vector<2x64xf32>
      %192 = arith.subf %177, %191 : vector<2x64xf32>
      %cst_78 = arith.constant 9.99999974E-6 : f32
      %193 = vector.broadcast %cst_78 : f32 to vector<2x1xf32>
      %194 = arith.addf %190, %193 : vector<2x1xf32>
      %195 = math.rsqrt %194 : vector<2x1xf32>
      %196 = vector.broadcast %195 : vector<2x1xf32> to vector<2x64xf32>
      %197 = arith.mulf %192, %196 : vector<2x64xf32>
      %198 = vector.broadcast %31 : vector<1x64xf32> to vector<2x64xf32>
      %199 = arith.mulf %197, %198 : vector<2x64xf32>
      %200 = vector.broadcast %32 : vector<1x64xf32> to vector<2x64xf32>
      %201 = arith.addf %199, %200 : vector<2x64xf32>
      %cst_79 = arith.constant dense<0.000000e+00> : vector<64xf32>
      %202 = vector.multi_reduction <add>, %201, %cst_79 [0] : vector<2x64xf32> to vector<64xf32>
      %203 = vector.shape_cast %202 : vector<64xf32> to vector<1x64xf32>
      %cst_80 = arith.constant 2.000000e+00 : f32
      %204 = vector.broadcast %cst_80 : f32 to vector<1x64xf32>
      %205 = arith.divf %203, %204 : vector<1x64xf32>
      %c0_81 = arith.constant 0 : index
      %c0_82 = arith.constant 0 : index
      %c0_83 = arith.constant 0 : index
      %206 = vector.load %arg8[%c0_81, %c0_82, %c0_83] : memref<1x1x64xf32, #tpu.memory_space<vmem>>, vector<1x1x64xf32>
      %207 = vector.shape_cast %206 : vector<1x1x64xf32> to vector<1x64xf32>
      %208 = vector.shape_cast %205 : vector<1x64xf32> to vector<1x1x64xf32>
      tpu.vector_store %arg8[%c0_81, %c0_82, %c0_83], %208 {strides = array<i32>} : memref<1x1x64xf32, #tpu.memory_space<vmem>>, vector<1x1x64xf32>,
    } else {
    }
    return
  }
  func.func @transform_0(%arg0: i32, %arg1: i32) -> (i32, i32, i32, i32) {
    %c0_i32 = arith.constant 0 : i32
    %c0_i32_0 = arith.constant 0 : i32
    %c0_i32_1 = arith.constant 0 : i32
    return %arg0, %c0_i32, %c0_i32_0, %arg1 : i32, i32, i32, i32
  }
  func.func @transform_1(%arg0: i32, %arg1: i32) -> (i32, i32) {
    %c0_i32 = arith.constant 0 : i32
    %c0_i32_0 = arith.constant 0 : i32
    %c0_i32_1 = arith.constant 0 : i32
    return %c0_i32, %c0_i32_0 : i32, i32
  }
  func.func @transform_2(%arg0: i32, %arg1: i32) -> (i32, i32) {
    %c0_i32 = arith.constant 0 : i32
    %c0_i32_0 = arith.constant 0 : i32
    %c0_i32_1 = arith.constant 0 : i32
    return %c0_i32, %c0_i32_0 : i32, i32
  }
  func.func @transform_3(%arg0: i32, %arg1: i32) -> (i32, i32) {
    %c0_i32 = arith.constant 0 : i32
    %c0_i32_0 = arith.constant 0 : i32
    %c0_i32_1 = arith.constant 0 : i32
    return %c0_i32, %c0_i32_0 : i32, i32
  }
  func.func @transform_4(%arg0: i32, %arg1: i32) -> (i32, i32) {
    %c0_i32 = arith.constant 0 : i32
    %c0_i32_0 = arith.constant 0 : i32
    %c0_i32_1 = arith.constant 0 : i32
    return %c0_i32, %c0_i32_0 : i32, i32
  }
  func.func @transform_5(%arg0: i32, %arg1: i32) -> (i32, i32) {
    %c0_i32 = arith.constant 0 : i32
    %c0_i32_0 = arith.constant 0 : i32
    %c0_i32_1 = arith.constant 0 : i32
    return %c0_i32, %c0_i32_0 : i32, i32
  }
  func.func @transform_6(%arg0: i32, %arg1: i32) -> (i32, i32, i32) {
    %c0_i32 = arith.constant 0 : i32
    %c0_i32_0 = arith.constant 0 : i32
    %c0_i32_1 = arith.constant 0 : i32
    return %arg0, %c0_i32, %c0_i32_0 : i32, i32, i32
  }
}

</mosaic_0001>

<llo_original>
// kernel: _encode_stacked.1
$region0: #{_encode_stacked.1}
  #allocation0 [shape = 'u32[]', space=smem, size = 0x4, offset = 0x4, fixed_abs, tag = 'smem constant byte address 0x4 - core index']
  #allocation1 [shape = 'u32[72,128]{1,0:T(1,128)}', space=vmem, size = 0x9000, scoped, tag = 'internal scratch']
  #allocation2 [shape = 'f32[2,64,128]{2,1,0:T(8,128)}', space=vmem, size = 0x10000, scoped, tag = 'scratch operand']
  %s0 = inlined_call_operand.vmem [shape: bf16[3,2,64,768], index: 0, kind: input, shape index: {}]
  %s1 = inlined_call_operand.vmem [shape: f32[64,192], index: 1, kind: input, shape index: {}]
  %s2 = inlined_call_operand.vmem [shape: f32[1,192], index: 2, kind: input, shape index: {}]
  %s3 = inlined_call_operand.vmem [shape: f32[64,64], index: 3, kind: input, shape index: {}]
  %s4 = inlined_call_operand.vmem [shape: f32[64,64], index: 4, kind: input, shape index: {}]
  %s5 = inlined_call_operand.vmem [shape: f32[8,64], index: 5, kind: input, shape index: {}]
  %s6 = inlined_call_operand.hbm [shape: f32[3,1,64], index: 6, kind: output, shape index: {}]
  %s7 = sld [smem:[#allocation0]]
  $region103: #{_encode_stacked.1} parent=0
    _
  %s9 = ssub.s32 1, %s7
  %s10 = scalar_select 0, %s9, %s7
  $region1: #{_encode_stacked.1} parent=0
    #allocation3 [shape = 'u8[131072]{0}', space=vmem, size = 0x20000, scoped, tag = 'input window, operand 0']
    #allocation4 [shape = 'u8[1024]{0}', space=vmem, size = 0x400, scoped, tag = 'output window, operand 0']
    #allocation5 [shape = 's32[2]{0}', space=sflag, size = 0x8, scoped, tag = 'scoped memory for _encode_stacked.1']
    %11 = vsyncpa [#allocation5], 0
    %s12 = scalar_lea.sflag [#allocation5], 1
    %13 = vsyncpa %s12, 0
    loop: start=0, step=1, limit=11
    $region2: #{_encode_stacked.1} parent=1 // loop_pre_header
      _
    $region3: #{_encode_stacked.1} parent=1 // loop_header
      %s15 = sphi 0, %s19
      %p16 = scmp.ge.s32.totalorder %s15, 11
      %s22 = sphi 0, %s34
      %s23 = sphi 0, %s30
      %s24 = sphi 0, %s22
      %s25 = sphi 0, %s23
      %s26 = sphi 0, %s24
      %s27 = sphi 0, %s25
      %s39 = sphi 0, %s41
      %s42 = sphi 0, %s39
      %s43 = sphi 0, %s42
      %s59 = sphi 0, %s43
      %s63 = sphi 0, %s63
      %s65 = sphi 0, %s63
      %s66 = sphi 0, %s65
      %s80 = sphi 0, %s66
      %s84 = sphi 0, %s84
      %s86 = sphi 0, %s84
      %s87 = sphi 0, %s86
      %s101 = sphi 0, %s87
      %s105 = sphi 0, %s105
      %s107 = sphi 0, %s105
      %s108 = sphi 0, %s107
      %s122 = sphi 0, %s108
      %s126 = sphi 0, %s126
      %s128 = sphi 0, %s126
      %s129 = sphi 0, %s128
      %s143 = sphi 0, %s129
      %s147 = sphi 0, %s147
      %s149 = sphi 0, %s147
      %s150 = sphi 0, %s149
      %s164 = sphi 0, %s150
      %s170 = sphi 0, %s172
      %s173 = sphi 0, %s170
      %s174 = sphi 0, %s173
      %s190 = sphi 0, %s174
    $region4: #{_encode_stacked.1} parent=1 // loop_header_branch
      %18 = sbr.rel (%p16) target = $region8
    $region5: #{_encode_stacked.1} parent=1 // loop_body
      %s20 = ssub.s32 %s15, 1
      %s21 = ssub.s32 %s15, 2
      %s28 = sadd.s32 1, %s23
      %p29 = scmp.ge.s32.totalorder %s28, 3
      %s30 = scalar_select %p29, 0, %s28
      %s31 = sadd.s32 1, %s22
      %s32 = scalar_select %p29, %s31, %s22
      %p33 = scmp.ge.s32.totalorder %s32, 3
      %s34 = scalar_select %p33, 0, %s32
      %s35 = ssub.s32 %s22, %s34
      %s36 = ssub.s32 %s23, %s30
      %s37 = sor.u32 %s35, %s36
      %p38 = scmp.eq.s32.totalorder %s37, 0
      %s40 = sadd.s32 %s39, 1
      %s41 = scalar_select %p38, %s39, %s40
      %p44 = pneg %p38
      %p45 = scmp.eq.s32.totalorder %s15, 8
      %p46 = por %p44, %p45
      %p47 = scmp.ne.s32.totalorder %s39, %s42
      %p48 = scmp.eq.s32.totalorder %s15, 0
      %p49 = por %p47, %p48
      %p50 = scmp.ne.s32.totalorder %s39, %s42
      %p51 = scmp.eq.s32.totalorder %s20, 8
      %p52 = por %p50, %p51
      %p53 = scmp.ne.s32.totalorder %s42, %s43
      %p54 = scmp.eq.s32.totalorder %s20, 0
      %p55 = por %p53, %p54
      %p56 = scmp.ne.s32.totalorder %s42, %s43
      %p57 = scmp.eq.s32.totalorder %s21, 8
      %p58 = por %p56, %p57
      %p60 = scmp.ne.s32.totalorder %s43, %s59
      %p61 = scmp.eq.s32.totalorder %s21, 0
      %p62 = por %p60, %p61
      %s64 = sadd.s32 %s63, 1
      %p67 = scmp.eq.s32.totalorder %s15, 8
      %p68 = scmp.ne.s32.totalorder %s63, %s65
      %p69 = scmp.eq.s32.totalorder %s15, 0
      %p70 = por %p68, %p69
      %p71 = scmp.ne.s32.totalorder %s63, %s65
      %p72 = scmp.eq.s32.totalorder %s20, 8
      %p73 = por %p71, %p72
      %p74 = scmp.ne.s32.totalorder %s65, %s66
      %p75 = scmp.eq.s32.totalorder %s20, 0
      %p76 = por %p74, %p75
      %p77 = scmp.ne.s32.totalorder %s65, %s66
      %p78 = scmp.eq.s32.totalorder %s21, 8
      %p79 = por %p77, %p78
      %p81 = scmp.ne.s32.totalorder %s66, %s80
      %p82 = scmp.eq.s32.totalorder %s21, 0
      %p83 = por %p81, %p82
      %s85 = sadd.s32 %s84, 1
      %p88 = scmp.eq.s32.totalorder %s15, 8
      %p89 = scmp.ne.s32.totalorder %s84, %s86
      %p90 = scmp.eq.s32.totalorder %s15, 0
      %p91 = por %p89, %p90
      %p92 = scmp.ne.s32.totalorder %s84, %s86
      %p93 = scmp.eq.s32.totalorder %s20, 8
      %p94 = por %p92, %p93
      %p95 = scmp.ne.s32.totalorder %s86, %s87
      %p96 = scmp.eq.s32.totalorder %s20, 0
      %p97 = por %p95, %p96
      %p98 = scmp.ne.s32.totalorder %s86, %s87
      %p99 = scmp.eq.s32.totalorder %s21, 8
      %p100 = por %p98, %p99
      %p102 = scmp.ne.s32.totalorder %s87, %s101
      %p103 = scmp.eq.s32.totalorder %s21, 0
      %p104 = por %p102, %p103
      %s106 = sadd.s32 %s105, 1
      %p109 = scmp.eq.s32.totalorder %s15, 8
      %p110 = scmp.ne.s32.totalorder %s105, %s107
      %p111 = scmp.eq.s32.totalorder %s15, 0
      %p112 = por %p110, %p111
      %p113 = scmp.ne.s32.totalorder %s105, %s107
      %p114 = scmp.eq.s32.totalorder %s20, 8
      %p115 = por %p113, %p114
      %p116 = scmp.ne.s32.totalorder %s107, %s108
      %p117 = scmp.eq.s32.totalorder %s20, 0
      %p118 = por %p116, %p117
      %p119 = scmp.ne.s32.totalorder %s107, %s108
      %p120 = scmp.eq.s32.totalorder %s21, 8
      %p121 = por %p119, %p120
      %p123 = scmp.ne.s32.totalorder %s108, %s122
      %p124 = scmp.eq.s32.totalorder %s21, 0
      %p125 = por %p123, %p124
      %s127 = sadd.s32 %s126, 1
      %p130 = scmp.eq.s32.totalorder %s15, 8
      %p131 = scmp.ne.s32.totalorder %s126, %s128
      %p132 = scmp.eq.s32.totalorder %s15, 0
      %p133 = por %p131, %p132
      %p134 = scmp.ne.s32.totalorder %s126, %s128
      %p135 = scmp.eq.s32.totalorder %s20, 8
      %p136 = por %p134, %p135
      %p137 = scmp.ne.s32.totalorder %s128, %s129
      %p138 = scmp.eq.s32.totalorder %s20, 0
      %p139 = por %p137, %p138
      %p140 = scmp.ne.s32.totalorder %s128, %s129
      %p141 = scmp.eq.s32.totalorder %s21, 8
      %p142 = por %p140, %p141
      %p144 = scmp.ne.s32.totalorder %s129, %s143
      %p145 = scmp.eq.s32.totalorder %s21, 0
      %p146 = por %p144, %p145
      %s148 = sadd.s32 %s147, 1
      %p151 = scmp.eq.s32.totalorder %s15, 8
      %p152 = scmp.ne.s32.totalorder %s147, %s149
      %p153 = scmp.eq.s32.totalorder %s15, 0
      %p154 = por %p152, %p153
      %p155 = scmp.ne.s32.totalorder %s147, %s149
      %p156 = scmp.eq.s32.totalorder %s20, 8
      %p157 = por %p155, %p156
      %p158 = scmp.ne.s32.totalorder %s149, %s150
      %p159 = scmp.eq.s32.totalorder %s20, 0
      %p160 = por %p158, %p159
      %p161 = scmp.ne.s32.totalorder %s149, %s150
      %p162 = scmp.eq.s32.totalorder %s21, 8
      %p163 = por %p161, %p162
      %p165 = scmp.ne.s32.totalorder %s150, %s164
      %p166 = scmp.eq.s32.totalorder %s21, 0
      %p167 = por %p165, %p166
      %s168 = ssub.s32 %s22, %s34
      %p169 = scmp.eq.s32.totalorder %s168, 0
      %s171 = sadd.s32 %s170, 1
      %s172 = scalar_select %p169, %s170, %s171
      %p175 = pneg %p169
      %p176 = scmp.eq.s32.totalorder %s15, 8
      %p177 = por %p175, %p176
      %p178 = scmp.ne.s32.totalorder %s170, %s173
      %p179 = scmp.eq.s32.totalorder %s15, 0
      %p180 = por %p178, %p179
      %p181 = scmp.ne.s32.totalorder %s170, %s173
      %p182 = scmp.eq.s32.totalorder %s20, 8
      %p183 = por %p181, %p182
      %p184 = scmp.ne.s32.totalorder %s173, %s174
      %p185 = scmp.eq.s32.totalorder %s20, 0
      %p186 = por %p184, %p185
      %p187 = scmp.ne.s32.totalorder %s173, %s174
      %p188 = scmp.eq.s32.totalorder %s21, 8
      %p189 = por %p187, %p188
      %p191 = scmp.ne.s32.totalorder %s174, %s190
      %p192 = scmp.eq.s32.totalorder %s21, 0
      %p193 = por %p191, %p192
      %p194 = scmp.le.s32.totalorder 1, %s15
      %p195 = scmp.lt.s32.totalorder %s15, 10
      %p196 = pnand %p194, %p195
      %p197 = pneg %p196
      // Predicated region
      $region9: #{_encode_stacked.1} parent=5 // pred_check
        _
      $region10: #{_encode_stacked.1} parent=5 // pred_check_branch
        %199 = sbr.rel (%p196) target = $region12
      $region11: #{_encode_stacked.1} parent=5 // pred_region
        %s200 = ssub.s32 %s15, 1
        // Predicated region
        $region13: #{_encode_stacked.1} parent=11 // pred_check
          %p201 = pneg %p76
        $region14: #{_encode_stacked.1} parent=11 // pred_check_branch
          %203 = sbr.rel (%p201) target = $region16
        $region15: #{_encode_stacked.1} parent=11 // pred_region
          _
        $region16: #{_encode_stacked.1} parent=11 // pred_fallthru
          _
        // Predicated region
        $region17: #{_encode_stacked.1} parent=11 // pred_check
          %p204 = pneg %p97
        $region18: #{_encode_stacked.1} parent=11 // pred_check_branch
          %206 = sbr.rel (%p204) target = $region20
        $region19: #{_encode_stacked.1} parent=11 // pred_region
          _
        $region20: #{_encode_stacked.1} parent=11 // pred_fallthru
          _
        // Predicated region
        $region21: #{_encode_stacked.1} parent=11 // pred_check
          %p207 = pneg %p118
        $region22: #{_encode_stacked.1} parent=11 // pred_check_branch
          %209 = sbr.rel (%p207) target = $region24
        $region23: #{_encode_stacked.1} parent=11 // pred_region
          _
        $region24: #{_encode_stacked.1} parent=11 // pred_fallthru
          _
        // Predicated region
        $region25: #{_encode_stacked.1} parent=11 // pred_check
          %p210 = pneg %p139
        $region26: #{_encode_stacked.1} parent=11 // pred_check_branch
          %212 = sbr.rel (%p210) target = $region28
        $region27: #{_encode_stacked.1} parent=11 // pred_region
          _
        $region28: #{_encode_stacked.1} parent=11 // pred_fallthru
          _
        // Predicated region
        $region29: #{_encode_stacked.1} parent=11 // pred_check
          %p213 = pneg %p160
        $region30: #{_encode_stacked.1} parent=11 // pred_check_branch
          %215 = sbr.rel (%p213) target = $region32
        $region31: #{_encode_stacked.1} parent=11 // pred_region
          _
        $region32: #{_encode_stacked.1} parent=11 // pred_fallthru
          _
      $region12: #{_encode_stacked.1} parent=5 // pred_fallthru
        _
      %p216 = scmp.lt.s32.totalorder %s15, 9
      // Predicated region
      $region33: #{_encode_stacked.1} parent=5 // pred_check
        %p217 = pneg %p216
      $region34: #{_encode_stacked.1} parent=5 // pred_check_branch
        %219 = sbr.rel (%p217) target = $region36
      $region35: #{_encode_stacked.1} parent=5 // pred_region
        // Predicated region
        $region37: #{_encode_stacked.1} parent=35 // pred_check
          %p220 = pneg %p49
        $region38: #{_encode_stacked.1} parent=35 // pred_check_branch
          %222 = sbr.rel (%p220) target = $region40
        $region39: #{_encode_stacked.1} parent=35 // pred_region
          %s223 = sand.u32 %s39, 1
          %s224 = sand.u32 %s39, 1
          %s225 = smul.addr %s224, 128
          %s226 = scalar_lea.vmem [#allocation3], %s225
          %s227 = smul.u32 2, %s23
          %s228 = smul.addr %s22, 96
          %s229 = sadd.s32 %s227, %s228
          %s230 = smul.addr %s229, 4
          %s231 = scalar_lea.vmem %s0, %s230
          // Predicated region
          $region41: #{_encode_stacked.1} parent=39 // pred_check
            _
          $region42: #{_encode_stacked.1} parent=39 // pred_check_branch
            %233 = sbr.rel (0) target = $region44
          $region43: #{_encode_stacked.1} parent=39 // pred_region
            // Predicated region
            $region45: #{_encode_stacked.1} parent=43 // pred_check
              _
            $region46: #{_encode_stacked.1} parent=43 // pred_check_branch
              %235 = sbr.rel (0) target = $region48
            $region47: #{_encode_stacked.1} parent=43 // pred_region
              // Predicated region
              $region60: #{_encode_stacked.1} parent=47 // pred_check
                _
              $region61: #{_encode_stacked.1} parent=47 // pred_check_branch
                %281 = sbr.rel (0) target = $region63
              $region62: #{_encode_stacked.1} parent=47 // pred_region
                loop: start=0, step=1, limit=1
                $region64: #{_encode_stacked.1} parent=62 // loop_pre_header
                  _
                $region65: #{_encode_stacked.1} parent=62 // loop_header
                  %s283 = sphi 0, %s287
                  %p284 = scmp.ge.s32.totalorder %s283, 1
                  %s288 = sphi %s231, %s231
                  %s289 = sphi %s226, %s226
                $region66: #{_encode_stacked.1} parent=62 // loop_header_branch
                  %286 = sbr.rel (%p284) target = $region70
                $region67: #{_encode_stacked.1} parent=62 // loop_body
                  %v290 = vld [vmem:[%s288] sm:$0xff]
                  %291 = vst [vmem:[%s289] sm:$0xff] %v290
                  %v292 = vld [vmem:[%s288 + $0x18] sm:$0xff]
                  %293 = vst [vmem:[%s289 + $0x8] sm:$0xff] %v292
                  %v294 = vld [vmem:[%s288 + $0x30] sm:$0xff]
                  %295 = vst [vmem:[%s289 + $0x10] sm:$0xff] %v294
                  %v296 = vld [vmem:[%s288 + $0x48] sm:$0xff]
                  %297 = vst [vmem:[%s289 + $0x18] sm:$0xff] %v296
                  %v298 = vld [vmem:[%s288 + $0x60] sm:$0xff]
                  %299 = vst [vmem:[%s289 + $0x20] sm:$0xff] %v298
                  %v300 = vld [vmem:[%s288 + $0x78] sm:$0xff]
                  %301 = vst [vmem:[%s289 + $0x28] sm:$0xff] %v300
                  %v302 = vld [vmem:[%s288 + $0x90] sm:$0xff]
                  %303 = vst [vmem:[%s289 + $0x30] sm:$0xff] %v302
                  %v304 = vld [vmem:[%s288 + $0xa8] sm:$0xff]
                  %305 = vst [vmem:[%s289 + $0x38] sm:$0xff] %v304
                  %v306 = vld [vmem:[%s288 + $0xc0] sm:$0xff]
                  %307 = vst [vmem:[%s289 + $0x40] sm:$0xff] %v306
                  %v308 = vld [vmem:[%s288 + $0xd8] sm:$0xff]
                  %309 = vst [vmem:[%s289 + $0x48] sm:$0xff] %v308
                  %v310 = vld [vmem:[%s288 + $0xf0] sm:$0xff]
                  %311 = vst [vmem:[%s289 + $0x50] sm:$0xff] %v310
                  %v312 = vld [vmem:[%s288 + $0x108] sm:$0xff]
                  %313 = vst [vmem:[%s289 + $0x58] sm:$0xff] %v312
                  %v314 = vld [vmem:[%s288 + $0x120] sm:$0xff]
                  %315 = vst [vmem:[%s289 + $0x60] sm:$0xff] %v314
                  %v316 = vld [vmem:[%s288 + $0x138] sm:$0xff]
                  %317 = vst [vmem:[%s289 + $0x68] sm:$0xff] %v316
                  %v318 = vld [vmem:[%s288 + $0x150] sm:$0xff]
                  %319 = vst [vmem:[%s289 + $0x70] sm:$0xff] %v318
                  %v320 = vld [vmem:[%s288 + $0x168] sm:$0xff]
                  %321 = vst [vmem:[%s289 + $0x78] sm:$0xff] %v320
                $region68: #{_encode_stacked.1} parent=62 // loop_footer
                  %s287 = sadd.s32 1, %s283
                $region69: #{_encode_stacked.1} parent=62 // loop_footer_branch
                  %282 = sbr.rel target = $region65
                $region70: #{_encode_stacked.1} parent=62 // loop_exit
                  _
              $region63: #{_encode_stacked.1} parent=47 // pred_fallthru
                _
              // Predicated region
              $region71: #{_encode_stacked.1} parent=47 // pred_check
                _
              $region72: #{_encode_stacked.1} parent=47 // pred_check_branch
                %323 = sbr.rel target = $region74
              $region73: #{_encode_stacked.1} parent=47 // pred_region
                _
              $region74: #{_encode_stacked.1} parent=47 // pred_fallthru
                _
            $region48: #{_encode_stacked.1} parent=43 // pred_fallthru
              _
            // Predicated region
            $region49: #{_encode_stacked.1} parent=43 // pred_check
              _
            $region50: #{_encode_stacked.1} parent=43 // pred_check_branch
              %237 = sbr.rel target = $region52
            $region51: #{_encode_stacked.1} parent=43 // pred_region
              %s239 = ssub.s32 256, 1
              loop: start=0, step=1, limit=1
              $region53: #{_encode_stacked.1} parent=51 // loop_pre_header
                _
              $region54: #{_encode_stacked.1} parent=51 // loop_header
                %s241 = sphi 0, %s245
                %p242 = scmp.ge.s32.totalorder %s241, 1
                %s246 = sphi %s231, %s231
                %s247 = sphi %s226, %s226
              $region55: #{_encode_stacked.1} parent=51 // loop_header_branch
                %244 = sbr.rel (%p242) target = $region59
              $region56: #{_encode_stacked.1} parent=51 // loop_body
                %v248 = vld [vmem:[%s246] sm:%s239]
                %249 = vst [vmem:[%s247] sm:%s239] %v248
                %v250 = vld [vmem:[%s246 + $0x18] sm:%s239]
                %251 = vst [vmem:[%s247 + $0x8] sm:%s239] %v250
                %v252 = vld [vmem:[%s246 + $0x30] sm:%s239]
                %253 = vst [vmem:[%s247 + $0x10] sm:%s239] %v252
                %v254 = vld [vmem:[%s246 + $0x48] sm:%s239]
                %255 = vst [vmem:[%s247 + $0x18] sm:%s239] %v254
                %v256 = vld [vmem:[%s246 + $0x60] sm:%s239]
                %257 = vst [vmem:[%s247 + $0x20] sm:%s239] %v256
                %v258 = vld [vmem:[%s246 + $0x78] sm:%s239]
                %259 = vst [vmem:[%s247 + $0x28] sm:%s239] %v258
                %v260 = vld [vmem:[%s246 + $0x90] sm:%s239]
                %261 = vst [vmem:[%s247 + $0x30] sm:%s239] %v260
                %v262 = vld [vmem:[%s246 + $0xa8] sm:%s239]
                %263 = vst [vmem:[%s247 + $0x38] sm:%s239] %v262
                %v264 = vld [vmem:[%s246 + $0xc0] sm:%s239]
                %265 = vst [vmem:[%s247 + $0x40] sm:%s239] %v264
                %v266 = vld [vmem:[%s246 + $0xd8] sm:%s239]
                %267 = vst [vmem:[%s247 + $0x48] sm:%s239] %v266
                %v268 = vld [vmem:[%s246 + $0xf0] sm:%s239]
                %269 = vst [vmem:[%s247 + $0x50] sm:%s239] %v268
                %v270 = vld [vmem:[%s246 + $0x108] sm:%s239]
                %271 = vst [vmem:[%s247 + $0x58] sm:%s239] %v270
                %v272 = vld [vmem:[%s246 + $0x120] sm:%s239]
                %273 = vst [vmem:[%s247 + $0x60] sm:%s239] %v272
                %v274 = vld [vmem:[%s246 + $0x138] sm:%s239]
                %275 = vst [vmem:[%s247 + $0x68] sm:%s239] %v274
                %v276 = vld [vmem:[%s246 + $0x150] sm:%s239]
                %277 = vst [vmem:[%s247 + $0x70] sm:%s239] %v276
                %v278 = vld [vmem:[%s246 + $0x168] sm:%s239]
                %279 = vst [vmem:[%s247 + $0x78] sm:%s239] %v278
              $region57: #{_encode_stacked.1} parent=51 // loop_footer
                %s245 = sadd.s32 1, %s241
              $region58: #{_encode_stacked.1} parent=51 // loop_footer_branch
                %240 = sbr.rel target = $region54
              $region59: #{_encode_stacked.1} parent=51 // loop_exit
                _
            $region52: #{_encode_stacked.1} parent=43 // pred_fallthru
              _
          $region44: #{_encode_stacked.1} parent=39 // pred_fallthru
            _
          %324 = vnop
        $region40: #{_encode_stacked.1} parent=35 // pred_fallthru
          _
      $region36: #{_encode_stacked.1} parent=5 // pred_fallthru
        _
      %p325 = scmp.le.s32.totalorder 1, %s15
      %p326 = scmp.lt.s32.totalorder %s15, 10
      %p327 = pnand %p325, %p326
      %p328 = pneg %p327
      // Predicated region
      $region75: #{_encode_stacked.1} parent=5 // pred_check
        _
      $region76: #{_encode_stacked.1} parent=5 // pred_check_branch
        %330 = sbr.rel (%p327) target = $region78
      $region77: #{_encode_stacked.1} parent=5 // pred_region
        %s331 = ssub.s32 %s15, 1
        %s332 = sand.u32 %s42, 1
        %s333 = sand.u32 %s42, 1
        %s334 = smul.addr %s333, 128
        %s335 = scalar_lea.vmem [#allocation3], %s334
        // Predicated region
        $region79: #{_encode_stacked.1} parent=77 // pred_check
          %p336 = pneg %p55
        $region80: #{_encode_stacked.1} parent=77 // pred_check_branch
          %338 = sbr.rel (%p336) target = $region82
        $region81: #{_encode_stacked.1} parent=77 // pred_region
          _
        $region82: #{_encode_stacked.1} parent=77 // pred_fallthru
          _
        %s339 = sand.u32 %s42, 1
        %s340 = sand.u32 %s42, 1
        %s341 = smul.addr %s340, 128
        %s342 = scalar_lea.vmem [#allocation3], %s341
        %p343 = pneg %p55
        %p344 = pneg %p52
        %p345 = pneg %p76
        %p346 = pneg %p73
        %p347 = pneg %p97
        %p348 = pneg %p94
        %p349 = pneg %p118
        %p350 = pneg %p115
        %p351 = pneg %p139
        %p352 = pneg %p136
        %p353 = pneg %p160
        %p354 = pneg %p157
        %p355 = pneg %p186
        %p356 = pneg %p183
        %s357 = sand.u32 %s173, 1
        %s358 = scalar_lea.sflag [#allocation5], %s357
        %s359 = sand.u32 %s173, 1
        %s360 = scalar_lea.vmem [#allocation4], %s359
        %s361 = smul.u32 2, %s25
        %p362 = scmp.eq.s32.totalorder %s25, 0
        // Predicated region
        $region83: #{_encode_stacked.1} parent=77 // pred_check
          %p363 = pneg %p362
        $region84: #{_encode_stacked.1} parent=77 // pred_check_branch
          %365 = sbr.rel (%p363) target = $region86
        $region85: #{_encode_stacked.1} parent=77 // pred_region
          %366 = vst [vmem:[#allocation2] sm:$0xff] 0.0
          %367 = vst [vmem:[#allocation2 + $0x8] sm:$0xff] 0.0
          %368 = vst [vmem:[#allocation2 + $0x10] sm:$0xff] 0.0
          %369 = vst [vmem:[#allocation2 + $0x18] sm:$0xff] 0.0
          %370 = vst [vmem:[#allocation2 + $0x20] sm:$0xff] 0.0
          %371 = vst [vmem:[#allocation2 + $0x28] sm:$0xff] 0.0
          %372 = vst [vmem:[#allocation2 + $0x30] sm:$0xff] 0.0
          %373 = vst [vmem:[#allocation2 + $0x38] sm:$0xff] 0.0
          %374 = vst [vmem:[#allocation2 + $0x40] sm:$0xff] 0.0
          %375 = vst [vmem:[#allocation2 + $0x48] sm:$0xff] 0.0
          %376 = vst [vmem:[#allocation2 + $0x50] sm:$0xff] 0.0
          %377 = vst [vmem:[#allocation2 + $0x58] sm:$0xff] 0.0
          %378 = vst [vmem:[#allocation2 + $0x60] sm:$0xff] 0.0
          %379 = vst [vmem:[#allocation2 + $0x68] sm:$0xff] 0.0
          %380 = vst [vmem:[#allocation2 + $0x70] sm:$0xff] 0.0
          %381 = vst [vmem:[#allocation2 + $0x78] sm:$0xff] 0.0
        $region86: #{_encode_stacked.1} parent=77 // pred_fallthru
          _
        %v382 = vld [vmem:[%s335] sm:$0xf]
        %v383 = vld [vmem:[%s335 + $0x8] sm:$0xf]
        %v384 = vld [vmem:[%s335 + $0x10] sm:$0xf]
        %v385 = vld [vmem:[%s335 + $0x18] sm:$0xf]
        %v386 = vld [vmem:[%s335 + $0x20] sm:$0xf]
        %v387 = vld [vmem:[%s335 + $0x28] sm:$0xf]
        %v388 = vld [vmem:[%s335 + $0x30] sm:$0xf]
        %v389 = vld [vmem:[%s335 + $0x38] sm:$0xf]
        %v390 = vld [vmem:[%s335 + $0x40] sm:$0xf]
        %v391 = vld [vmem:[%s335 + $0x48] sm:$0xf]
        %v392 = vld [vmem:[%s335 + $0x50] sm:$0xf]
        %v393 = vld [vmem:[%s335 + $0x58] sm:$0xf]
        %v394 = vld [vmem:[%s335 + $0x60] sm:$0xf]
        %v395 = vld [vmem:[%s335 + $0x68] sm:$0xf]
        %v396 = vld [vmem:[%s335 + $0x70] sm:$0xf]
        %v397 = vld [vmem:[%s335 + $0x78] sm:$0xf]
        %v398 = vunpack.c.l.bf16 %v382
        %v399 = vunpack.c.l.bf16 %v383
        %v400 = vunpack.c.l.bf16 %v384
        %v401 = vunpack.c.l.bf16 %v385
        %v402 = vunpack.c.l.bf16 %v386
        %v403 = vunpack.c.l.bf16 %v387
        %v404 = vunpack.c.l.bf16 %v388
        %v405 = vunpack.c.l.bf16 %v389
        %v406 = vunpack.c.l.bf16 %v390
        %v407 = vunpack.c.l.bf16 %v391
        %v408 = vunpack.c.l.bf16 %v392
        %v409 = vunpack.c.l.bf16 %v393
        %v410 = vunpack.c.l.bf16 %v394
        %v411 = vunpack.c.l.bf16 %v395
        %v412 = vunpack.c.l.bf16 %v396
        %v413 = vunpack.c.l.bf16 %v397
        %v414 = vadd.f32 %v398, 0.0
        %v415 = vadd.f32 %v399, 0.0
        %v416 = vadd.f32 %v400, 0.0
        %v417 = vadd.f32 %v401, 0.0
        %v418 = vadd.f32 %v402, 0.0
        %v419 = vadd.f32 %v403, 0.0
        %v420 = vadd.f32 %v404, 0.0
        %v421 = vadd.f32 %v405, 0.0
        %v422 = vadd.f32 %v406, 0.0
        %v423 = vadd.f32 %v407, 0.0
        %v424 = vadd.f32 %v408, 0.0
        %v425 = vadd.f32 %v409, 0.0
        %v426 = vadd.f32 %v410, 0.0
        %v427 = vadd.f32 %v411, 0.0
        %v428 = vadd.f32 %v412, 0.0
        %v429 = vadd.f32 %v413, 0.0
        %s430 = scalar_lea.vmem %s335, 4 [#allocation3]
        %v431 = vld [vmem:[%s430] sm:$0xf]
        %v432 = vld [vmem:[%s430 + $0x8] sm:$0xf]
        %v433 = vld [vmem:[%s430 + $0x10] sm:$0xf]
        %v434 = vld [vmem:[%s430 + $0x18] sm:$0xf]
        %v435 = vld [vmem:[%s430 + $0x20] sm:$0xf]
        %v436 = vld [vmem:[%s430 + $0x28] sm:$0xf]
        %v437 = vld [vmem:[%s430 + $0x30] sm:$0xf]
        %v438 = vld [vmem:[%s430 + $0x38] sm:$0xf]
        %v439 = vld [vmem:[%s430 + $0x40] sm:$0xf]
        %v440 = vld [vmem:[%s430 + $0x48] sm:$0xf]
        %v441 = vld [vmem:[%s430 + $0x50] sm:$0xf]
        %v442 = vld [vmem:[%s430 + $0x58] sm:$0xf]
        %v443 = vld [vmem:[%s430 + $0x60] sm:$0xf]
        %v444 = vld [vmem:[%s430 + $0x68] sm:$0xf]
        %v445 = vld [vmem:[%s430 + $0x70] sm:$0xf]
        %v446 = vld [vmem:[%s430 + $0x78] sm:$0xf]
        %v447 = vunpack.c.l.bf16 %v431
        %v448 = vunpack.c.l.bf16 %v432
        %v449 = vunpack.c.l.bf16 %v433
        %v450 = vunpack.c.l.bf16 %v434
        %v451 = vunpack.c.l.bf16 %v435
        %v452 = vunpack.c.l.bf16 %v436
        %v453 = vunpack.c.l.bf16 %v437
        %v454 = vunpack.c.l.bf16 %v438
        %v455 = vunpack.c.l.bf16 %v439
        %v456 = vunpack.c.l.bf16 %v440
        %v457 = vunpack.c.l.bf16 %v441
        %v458 = vunpack.c.l.bf16 %v442
        %v459 = vunpack.c.l.bf16 %v443
        %v460 = vunpack.c.l.bf16 %v444
        %v461 = vunpack.c.l.bf16 %v445
        %v462 = vunpack.c.l.bf16 %v446
        %v463 = vadd.f32 %v414, %v447
        %v464 = vadd.f32 %v415, %v448
        %v465 = vadd.f32 %v416, %v449
        %v466 = vadd.f32 %v417, %v450
        %v467 = vadd.f32 %v418, %v451
        %v468 = vadd.f32 %v419, %v452
        %v469 = vadd.f32 %v420, %v453
        %v470 = vadd.f32 %v421, %v454
        %v471 = vadd.f32 %v422, %v455
        %v472 = vadd.f32 %v423, %v456
        %v473 = vadd.f32 %v424, %v457
        %v474 = vadd.f32 %v425, %v458
        %v475 = vadd.f32 %v426, %v459
        %v476 = vadd.f32 %v427, %v460
        %v477 = vadd.f32 %v428, %v461
        %v478 = vadd.f32 %v429, %v462
        %v479 = vld [vmem:[#allocation2] sm:$0xff]
        %v480 = vld [vmem:[#allocation2 + $0x8] sm:$0xff]
        %v481 = vld [vmem:[#allocation2 + $0x10] sm:$0xff]
        %v482 = vld [vmem:[#allocation2 + $0x18] sm:$0xff]
        %v483 = vld [vmem:[#allocation2 + $0x20] sm:$0xff]
        %v484 = vld [vmem:[#allocation2 + $0x28] sm:$0xff]
        %v485 = vld [vmem:[#allocation2 + $0x30] sm:$0xff]
        %v486 = vld [vmem:[#allocation2 + $0x38] sm:$0xff]
        %v487 = vld [vmem:[#allocation2 + $0x40] sm:$0xff]
        %v488 = vld [vmem:[#allocation2 + $0x48] sm:$0xff]
        %v489 = vld [vmem:[#allocation2 + $0x50] sm:$0xff]
        %v490 = vld [vmem:[#allocation2 + $0x58] sm:$0xff]
        %v491 = vld [vmem:[#allocation2 + $0x60] sm:$0xff]
        %v492 = vld [vmem:[#allocation2 + $0x68] sm:$0xff]
        %v493 = vld [vmem:[#allocation2 + $0x70] sm:$0xff]
        %v494 = vld [vmem:[#allocation2 + $0x78] sm:$0xff]
        %v495 = vadd.f32 %v479, %v463
        %v496 = vadd.f32 %v480, %v464
        %v497 = vadd.f32 %v481, %v465
        %v498 = vadd.f32 %v482, %v466
        %v499 = vadd.f32 %v483, %v467
        %v500 = vadd.f32 %v484, %v468
        %v501 = vadd.f32 %v485, %v469
        %v502 = vadd.f32 %v486, %v470
        %v503 = vadd.f32 %v487, %v471
        %v504 = vadd.f32 %v488, %v472
        %v505 = vadd.f32 %v489, %v473
        %v506 = vadd.f32 %v490, %v474
        %v507 = vadd.f32 %v491, %v475
        %v508 = vadd.f32 %v492, %v476
        %v509 = vadd.f32 %v493, %v477
        %v510 = vadd.f32 %v494, %v478
        %511 = vst [vmem:[#allocation2] sm:$0xff] %v495
        %512 = vst [vmem:[#allocation2 + $0x8] sm:$0xff] %v496
        %513 = vst [vmem:[#allocation2 + $0x10] sm:$0xff] %v497
        %514 = vst [vmem:[#allocation2 + $0x18] sm:$0xff] %v498
        %515 = vst [vmem:[#allocation2 + $0x20] sm:$0xff] %v499
        %516 = vst [vmem:[#allocation2 + $0x28] sm:$0xff] %v500
        %517 = vst [vmem:[#allocation2 + $0x30] sm:$0xff] %v501
        %518 = vst [vmem:[#allocation2 + $0x38] sm:$0xff] %v502
        %519 = vst [vmem:[#allocation2 + $0x40] sm:$0xff] %v503
        %520 = vst [vmem:[#allocation2 + $0x48] sm:$0xff] %v504
        %521 = vst [vmem:[#allocation2 + $0x50] sm:$0xff] %v505
        %522 = vst [vmem:[#allocation2 + $0x58] sm:$0xff] %v506
        %523 = vst [vmem:[#allocation2 + $0x60] sm:$0xff] %v507
        %524 = vst [vmem:[#allocation2 + $0x68] sm:$0xff] %v508
        %525 = vst [vmem:[#allocation2 + $0x70] sm:$0xff] %v509
        %526 = vst [vmem:[#allocation2 + $0x78] sm:$0xff] %v510
        %p527 = scmp.eq.s32.totalorder %s25, 2
        // Predicated region
        $region87: #{_encode_stacked.1} parent=77 // pred_check
          %p528 = pneg %p527
        $region88: #{_encode_stacked.1} parent=77 // pred_check_branch
          %530 = sbr.rel (%p528) target = $region90
        $region89: #{_encode_stacked.1} parent=77 // pred_region
          %v531 = vld [vmem:[#allocation2] sm:$0xff]
          %v532 = vld [vmem:[#allocation2 + $0x8] sm:$0xff]
          %v533 = vld [vmem:[#allocation2 + $0x10] sm:$0xff]
          %v534 = vld [vmem:[#allocation2 + $0x18] sm:$0xff]
          %v535 = vld [vmem:[#allocation2 + $0x20] sm:$0xff]
          %v536 = vld [vmem:[#allocation2 + $0x28] sm:$0xff]
          %v537 = vld [vmem:[#allocation2 + $0x30] sm:$0xff]
          %v538 = vld [vmem:[#allocation2 + $0x38] sm:$0xff]
          %v539 = vld [vmem:[#allocation2 + $0x40] sm:$0xff]
          %v540 = vld [vmem:[#allocation2 + $0x48] sm:$0xff]
          %v541 = vld [vmem:[#allocation2 + $0x50] sm:$0xff]
          %v542 = vld [vmem:[#allocation2 + $0x58] sm:$0xff]
          %v543 = vld [vmem:[#allocation2 + $0x60] sm:$0xff]
          %v544 = vld [vmem:[#allocation2 + $0x68] sm:$0xff]
          %v545 = vld [vmem:[#allocation2 + $0x70] sm:$0xff]
          %v546 = vld [vmem:[#allocation2 + $0x78] sm:$0xff]
          %547 = vadd.xlane.f32.xlu0 %v531
          %v548 = vpop.xlane.xlu0 %547
          %549 = vadd.xlane.f32.xlu0 %v532
          %v550 = vpop.xlane.xlu0 %549
          %551 = vadd.xlane.f32.xlu0 %v533
          %v552 = vpop.xlane.xlu0 %551
          %553 = vadd.xlane.f32.xlu0 %v534
          %v554 = vpop.xlane.xlu0 %553
          %555 = vadd.xlane.f32.xlu0 %v535
          %v556 = vpop.xlane.xlu0 %555
          %557 = vadd.xlane.f32.xlu0 %v536
          %v558 = vpop.xlane.xlu0 %557
          %559 = vadd.xlane.f32.xlu0 %v537
          %v560 = vpop.xlane.xlu0 %559
          %561 = vadd.xlane.f32.xlu0 %v538
          %v562 = vpop.xlane.xlu0 %561
          %563 = vadd.xlane.f32.xlu0 %v539
          %v564 = vpop.xlane.xlu0 %563
          %565 = vadd.xlane.f32.xlu0 %v540
          %v566 = vpop.xlane.xlu0 %565
          %567 = vadd.xlane.f32.xlu0 %v541
          %v568 = vpop.xlane.xlu0 %567
          %569 = vadd.xlane.f32.xlu0 %v542
          %v570 = vpop.xlane.xlu0 %569
          %571 = vadd.xlane.f32.xlu0 %v543
          %v572 = vpop.xlane.xlu0 %571
          %573 = vadd.xlane.f32.xlu0 %v544
          %v574 = vpop.xlane.xlu0 %573
          %575 = vadd.xlane.f32.xlu0 %v545
          %v576 = vpop.xlane.xlu0 %575
          %577 = vadd.xlane.f32.xlu0 %v546
          %v578 = vpop.xlane.xlu0 %577
          %v579 = vmul.f32 %v548, 0.0017361111
          %v580 = vmul.f32 %v550, 0.0017361111
          %v581 = vmul.f32 %v552, 0.0017361111
          %v582 = vmul.f32 %v554, 0.0017361111
          %v583 = vmul.f32 %v556, 0.0017361111
          %v584 = vmul.f32 %v558, 0.0017361111
          %v585 = vmul.f32 %v560, 0.0017361111
          %v586 = vmul.f32 %v562, 0.0017361111
          %v587 = vmul.f32 %v564, 0.0017361111
          %v588 = vmul.f32 %v566, 0.0017361111
          %v589 = vmul.f32 %v568, 0.0017361111
          %v590 = vmul.f32 %v570, 0.0017361111
          %v591 = vmul.f32 %v572, 0.0017361111
          %v592 = vmul.f32 %v574, 0.0017361111
          %v593 = vmul.f32 %v576, 0.0017361111
          %v594 = vmul.f32 %v578, 0.0017361111
          %v595 = vld [vmem:[%s5] sm:$0xff]
          %v596 = vld [vmem:[%s1] sm:$0xff]
          %v597 = vld [vmem:[%s1 + $0x8] sm:$0xff]
          %v598 = vld [vmem:[%s1 + $0x10] sm:$0xff]
          %v599 = vld [vmem:[%s1 + $0x18] sm:$0xff]
          %v600 = vld [vmem:[%s1 + $0x20] sm:$0xff]
          %v601 = vld [vmem:[%s1 + $0x28] sm:$0xff]
          %v602 = vld [vmem:[%s1 + $0x30] sm:$0xff]
          %v603 = vld [vmem:[%s1 + $0x38] sm:$0xff]
          %v604 = vld [vmem:[%s1 + $0x40] sm:$0xff]
          %v605 = vld [vmem:[%s1 + $0x48] sm:$0xff]
          %v606 = vld [vmem:[%s1 + $0x50] sm:$0xff]
          %v607 = vld [vmem:[%s1 + $0x58] sm:$0xff]
          %v608 = vld [vmem:[%s1 + $0x60] sm:$0xff]
          %v609 = vld [vmem:[%s1 + $0x68] sm:$0xff]
          %v610 = vld [vmem:[%s1 + $0x70] sm:$0xff]
          %v611 = vld [vmem:[%s1 + $0x78] sm:$0xff]
          %v612 = vld [vmem:[%s2] sm:$0x3]
          %v614 = vperm.slane %v612, 0
          %v615 = vperm.slane %v612, 1
          %v634 = vlaneseq
          %v635 = vand.u32 %v634, 127
          %v636 = vperm.slane %v579, %v635
          %v637 = vadd.s32 %v635, 4294967288
          %v638 = vperm.slane %v580, %v637
          %vm639 = vcmask 130112
          %v640 = vsel %vm639, %v638, %v636
          %v641 = vadd.s32 %v635, 4294967280
          %v642 = vperm.slane %v581, %v641
          %vm643 = vcmask 195712
          %v644 = vsel %vm643, %v642, %v640
          %v645 = vadd.s32 %v635, 4294967272
          %v646 = vperm.slane %v582, %v645
          %vm647 = vcmask 261312
          %v648 = vsel %vm647, %v646, %v644
          %v649 = vadd.s32 %v635, 4294967264
          %v650 = vperm.slane %v583, %v649
          %vm651 = vcmask 326912
          %v652 = vsel %vm651, %v650, %v648
          %v653 = vadd.s32 %v635, 4294967256
          %v654 = vperm.slane %v584, %v653
          %vm655 = vcmask 392512
          %v656 = vsel %vm655, %v654, %v652
          %v657 = vadd.s32 %v635, 4294967248
          %v658 = vperm.slane %v585, %v657
          %vm659 = vcmask 458112
          %v660 = vsel %vm659, %v658, %v656
          %v661 = vadd.s32 %v635, 4294967240
          %v662 = vperm.slane %v586, %v661
          %vm663 = vcmask 523712
          %v664 = vsel %vm663, %v662, %v660
          %v665 = vperm.slane %v587, %v635
          %v666 = vperm.slane %v588, %v637
          %v667 = vsel %vm639, %v666, %v665
          %v668 = vperm.slane %v589, %v641
          %v669 = vsel %vm643, %v668, %v667
          %v670 = vperm.slane %v590, %v645
          %v671 = vsel %vm647, %v670, %v669
          %v672 = vperm.slane %v591, %v649
          %v673 = vsel %vm651, %v672, %v671
          %v674 = vperm.slane %v592, %v653
          %v675 = vsel %vm655, %v674, %v673
          %v676 = vperm.slane %v593, %v657
          %v677 = vsel %vm659, %v676, %v675
          %v678 = vperm.slane %v594, %v661
          %v679 = vsel %vm663, %v678, %v677
          %vm680 = vcmask 1041409
          %v681 = vsel %vm680, %v679, %v664
          %vm682 = vcmask 523264
          %v683 = vsel %vm682, %v681, 0
          %685 = vmatpush.msra.mxu0 0.0
          %686 = vmatpush.msra.mxu0 0.0
          %687 = vmatpush.msra.mxu0 0.0
          %688 = vmatpush.msra.mxu0 0.0
          %689 = vmatpush.msra.mxu0 0.0
          %690 = vmatpush.msra.mxu0 0.0
          %691 = vmatpush.msra.mxu0 0.0
          %692 = vmatpush.msra.mxu0 0.0
          %693 = vmatpush.msra.mxu0 %v610
          %694 = vmatpush.msra.mxu0 %v608
          %695 = vmatpush.msra.mxu0 %v606
          %696 = vmatpush.msra.mxu0 %v604
          %697 = vmatpush.msra.mxu0 %v602
          %698 = vmatpush.msra.mxu0 %v600
          %699 = vmatpush.msra.mxu0 %v598
          %700 = vmatpush.msra.mxu0 %v596
          %701 = vmatmul.f32.gmra.mxu0 %v683
          %v702 = vpop.f32.mrf.mxu0
          %v703 = vadd.f32 %v614, %v702
          %704 = vdwg.mxu0
          %705 = vmatpush.msra.mxu0 0.0
          %706 = vmatpush.msra.mxu0 0.0
          %707 = vmatpush.msra.mxu0 0.0
          %708 = vmatpush.msra.mxu0 0.0
          %709 = vmatpush.msra.mxu0 0.0
          %710 = vmatpush.msra.mxu0 0.0
          %711 = vmatpush.msra.mxu0 0.0
          %712 = vmatpush.msra.mxu0 0.0
          %713 = vmatpush.msra.mxu0 %v611
          %714 = vmatpush.msra.mxu0 %v609
          %715 = vmatpush.msra.mxu0 %v607
          %716 = vmatpush.msra.mxu0 %v605
          %717 = vmatpush.msra.mxu0 %v603
          %718 = vmatpush.msra.mxu0 %v601
          %719 = vmatpush.msra.mxu0 %v599
          %720 = vmatpush.msra.mxu0 %v597
          %721 = vmatmul.f32.gmra.mxu0 %v683
          %v722 = vpop.f32.mrf.mxu0
          %v723 = vadd.f32 %v615, %v722
          %724 = vdwg.mxu0
          %v725 = vperm.slane %v703, 0
          %v726 = vlaneseq
          %v727 = vshrl.u32 %v726, 7
          %729 = vset.pattern.permute.xlu0 %v727
          %730 = vperm.xlu0 %729, %v725
          %v731 = vpop.permute.xlu0 %730
          %v732 = vlaneseq
          %v733 = vshrl.u32 %v732, 7
          %v734 = vadd.s32 %v733, 8
          %735 = vset.pattern.permute.xlu0 %v734
          %736 = vperm.xlu0 %735, %v725
          %v737 = vpop.permute.xlu0 %736
          %v738 = vlaneseq
          %v739 = vshrl.u32 %v738, 7
          %v740 = vadd.s32 %v739, 16
          %741 = vset.pattern.permute.xlu0 %v740
          %742 = vperm.xlu0 %741, %v725
          %v743 = vpop.permute.xlu0 %742
          %v744 = vlaneseq
          %v745 = vshrl.u32 %v744, 7
          %v746 = vadd.s32 %v745, 24
          %747 = vset.pattern.permute.xlu0 %v746
          %748 = vperm.xlu0 %747, %v725
          %v749 = vpop.permute.xlu0 %748
          %v750 = vlaneseq
          %v751 = vshrl.u32 %v750, 7
          %v752 = vadd.s32 %v751, 32
          %753 = vset.pattern.permute.xlu0 %v752
          %754 = vperm.xlu0 %753, %v725
          %v755 = vpop.permute.xlu0 %754
          %v756 = vlaneseq
          %v757 = vshrl.u32 %v756, 7
          %v758 = vadd.s32 %v757, 40
          %759 = vset.pattern.permute.xlu0 %v758
          %760 = vperm.xlu0 %759, %v725
          %v761 = vpop.permute.xlu0 %760
          %v762 = vlaneseq
          %v763 = vshrl.u32 %v762, 7
          %v764 = vadd.s32 %v763, 48
          %765 = vset.pattern.permute.xlu0 %v764
          %766 = vperm.xlu0 %765, %v725
          %v767 = vpop.permute.xlu0 %766
          %v768 = vlaneseq
          %v769 = vshrl.u32 %v768, 7
          %v770 = vadd.s32 %v769, 56
          %771 = vset.pattern.permute.xlu0 %v770
          %772 = vperm.xlu0 %771, %v725
          %v773 = vpop.permute.xlu0 %772
          %v774 = vperm.slane %v703, 1
          %v775 = vlaneseq
          %v776 = vshrl.u32 %v775, 7
          %778 = vset.pattern.permute.xlu0 %v776
          %779 = vperm.xlu0 %778, %v774
          %v780 = vpop.permute.xlu0 %779
          %v781 = vlaneseq
          %v782 = vshrl.u32 %v781, 7
          %v783 = vadd.s32 %v782, 8
          %784 = vset.pattern.permute.xlu0 %v783
          %785 = vperm.xlu0 %784, %v774
          %v786 = vpop.permute.xlu0 %785
          %v787 = vlaneseq
          %v788 = vshrl.u32 %v787, 7
          %v789 = vadd.s32 %v788, 16
          %790 = vset.pattern.permute.xlu0 %v789
          %791 = vperm.xlu0 %790, %v774
          %v792 = vpop.permute.xlu0 %791
          %v793 = vlaneseq
          %v794 = vshrl.u32 %v793, 7
          %v795 = vadd.s32 %v794, 24
          %796 = vset.pattern.permute.xlu0 %v795
          %797 = vperm.xlu0 %796, %v774
          %v798 = vpop.permute.xlu0 %797
          %v799 = vlaneseq
          %v800 = vshrl.u32 %v799, 7
          %v801 = vadd.s32 %v800, 32
          %802 = vset.pattern.permute.xlu0 %v801
          %803 = vperm.xlu0 %802, %v774
          %v804 = vpop.permute.xlu0 %803
          %v805 = vlaneseq
          %v806 = vshrl.u32 %v805, 7
          %v807 = vadd.s32 %v806, 40
          %808 = vset.pattern.permute.xlu0 %v807
          %809 = vperm.xlu0 %808, %v774
          %v810 = vpop.permute.xlu0 %809
          %v811 = vlaneseq
          %v812 = vshrl.u32 %v811, 7
          %v813 = vadd.s32 %v812, 48
          %814 = vset.pattern.permute.xlu0 %v813
          %815 = vperm.xlu0 %814, %v774
          %v816 = vpop.permute.xlu0 %815
          %v817 = vlaneseq
          %v818 = vshrl.u32 %v817, 7
          %v819 = vadd.s32 %v818, 56
          %820 = vset.pattern.permute.xlu0 %v819
          %821 = vperm.xlu0 %820, %v774
          %v822 = vpop.permute.xlu0 %821
          %v824 = vrot.slane %v703, 1
          %v825 = vperm.slane %v703, 0
          %v826 = vperm.slane %v824, 0
          %v829 = vmul.f32 %v731, %v825
          %v830 = vmul.f32 %v737, %v825
          %v831 = vmul.f32 %v743, %v825
          %v832 = vmul.f32 %v749, %v825
          %v833 = vmul.f32 %v755, %v825
          %v834 = vmul.f32 %v761, %v825
          %v835 = vmul.f32 %v767, %v825
          %v836 = vmul.f32 %v773, %v825
          %v837 = vmul.f32 %v780, %v826
          %v838 = vmul.f32 %v786, %v826
          %v839 = vmul.f32 %v792, %v826
          %v840 = vmul.f32 %v798, %v826
          %v841 = vmul.f32 %v804, %v826
          %v842 = vmul.f32 %v810, %v826
          %v843 = vmul.f32 %v816, %v826
          %v844 = vmul.f32 %v822, %v826
          %v845 = vmul.f32 %v829, 0.125
          %v846 = vmul.f32 %v830, 0.125
          %v847 = vmul.f32 %v831, 0.125
          %v848 = vmul.f32 %v832, 0.125
          %v849 = vmul.f32 %v833, 0.125
          %v850 = vmul.f32 %v834, 0.125
          %v851 = vmul.f32 %v835, 0.125
          %v852 = vmul.f32 %v836, 0.125
          %v853 = vmul.f32 %v837, 0.125
          %v854 = vmul.f32 %v838, 0.125
          %v855 = vmul.f32 %v839, 0.125
          %v856 = vmul.f32 %v840, 0.125
          %v857 = vmul.f32 %v841, 0.125
          %v858 = vmul.f32 %v842, 0.125
          %v859 = vmul.f32 %v843, 0.125
          %v860 = vmul.f32 %v844, 0.125
          %vm861 = vcmask 1048064
          %v862 = vsel %vm861, %v845, -inf
          %863 = vmax.xlane.f32.xlu0 %v862
          %v864 = vpop.xlane.xlu0 %863
          %v865 = vsel %vm861, %v846, -inf
          %866 = vmax.xlane.f32.xlu0 %v865
          %v867 = vpop.xlane.xlu0 %866
          %v868 = vsel %vm861, %v847, -inf
          %869 = vmax.xlane.f32.xlu0 %v868
          %v870 = vpop.xlane.xlu0 %869
          %v871 = vsel %vm861, %v848, -inf
          %872 = vmax.xlane.f32.xlu0 %v871
          %v873 = vpop.xlane.xlu0 %872
          %v874 = vsel %vm861, %v849, -inf
          %875 = vmax.xlane.f32.xlu0 %v874
          %v876 = vpop.xlane.xlu0 %875
          %v877 = vsel %vm861, %v850, -inf
          %878 = vmax.xlane.f32.xlu0 %v877
          %v879 = vpop.xlane.xlu0 %878
          %v880 = vsel %vm861, %v851, -inf
          %881 = vmax.xlane.f32.xlu0 %v880
          %v882 = vpop.xlane.xlu0 %881
          %v883 = vsel %vm861, %v852, -inf
          %884 = vmax.xlane.f32.xlu0 %v883
          %v885 = vpop.xlane.xlu0 %884
          %v886 = vsel %vm861, %v853, -inf
          %887 = vmax.xlane.f32.xlu0 %v886
          %v888 = vpop.xlane.xlu0 %887
          %v889 = vsel %vm861, %v854, -inf
          %890 = vmax.xlane.f32.xlu0 %v889
          %v891 = vpop.xlane.xlu0 %890
          %v892 = vsel %vm861, %v855, -inf
          %893 = vmax.xlane.f32.xlu0 %v892
          %v894 = vpop.xlane.xlu0 %893
          %v895 = vsel %vm861, %v856, -inf
          %896 = vmax.xlane.f32.xlu0 %v895
          %v897 = vpop.xlane.xlu0 %896
          %v898 = vsel %vm861, %v857, -inf
          %899 = vmax.xlane.f32.xlu0 %v898
          %v900 = vpop.xlane.xlu0 %899
          %v901 = vsel %vm861, %v858, -inf
          %902 = vmax.xlane.f32.xlu0 %v901
          %v903 = vpop.xlane.xlu0 %902
          %v904 = vsel %vm861, %v859, -inf
          %905 = vmax.xlane.f32.xlu0 %v904
          %v906 = vpop.xlane.xlu0 %905
          %v907 = vsel %vm861, %v860, -inf
          %908 = vmax.xlane.f32.xlu0 %v907
          %v909 = vpop.xlane.xlu0 %908
          %v910 = vsub.f32 %v845, %v864
          %v911 = vsub.f32 %v846, %v867
          %v912 = vsub.f32 %v847, %v870
          %v913 = vsub.f32 %v848, %v873
          %v914 = vsub.f32 %v849, %v876
          %v915 = vsub.f32 %v850, %v879
          %v916 = vsub.f32 %v851, %v882
          %v917 = vsub.f32 %v852, %v885
          %v918 = vsub.f32 %v853, %v888
          %v919 = vsub.f32 %v854, %v891
          %v920 = vsub.f32 %v855, %v894
          %v921 = vsub.f32 %v856, %v897
          %v922 = vsub.f32 %v857, %v900
          %v923 = vsub.f32 %v858, %v903
          %v924 = vsub.f32 %v859, %v906
          %v925 = vsub.f32 %v860, %v909
          %v926 = vmul.f32 %v910, 1.442695
          %v927 = vpow.pop %v926
          %v928 = vmul.f32 %v911, 1.442695
          %v929 = vpow.pop %v928
          %v930 = vmul.f32 %v912, 1.442695
          %v931 = vpow.pop %v930
          %v932 = vmul.f32 %v913, 1.442695
          %v933 = vpow.pop %v932
          %v934 = vmul.f32 %v914, 1.442695
          %v935 = vpow.pop %v934
          %v936 = vmul.f32 %v915, 1.442695
          %v937 = vpow.pop %v936
          %v938 = vmul.f32 %v916, 1.442695
          %v939 = vpow.pop %v938
          %v940 = vmul.f32 %v917, 1.442695
          %v941 = vpow.pop %v940
          %v942 = vmul.f32 %v918, 1.442695
          %v943 = vpow.pop %v942
          %v944 = vmul.f32 %v919, 1.442695
          %v945 = vpow.pop %v944
          %v946 = vmul.f32 %v920, 1.442695
          %v947 = vpow.pop %v946
          %v948 = vmul.f32 %v921, 1.442695
          %v949 = vpow.pop %v948
          %v950 = vmul.f32 %v922, 1.442695
          %v951 = vpow.pop %v950
          %v952 = vmul.f32 %v923, 1.442695
          %v953 = vpow.pop %v952
          %v954 = vmul.f32 %v924, 1.442695
          %v955 = vpow.pop %v954
          %v956 = vmul.f32 %v925, 1.442695
          %v957 = vpow.pop %v956
          %974 = vrot.lane.b32.xlu0 %v927, 64
          %v975 = vpop.permute.xlu0 %974
          %976 = vrot.lane.b32.xlu0 %v929, 64
          %v977 = vpop.permute.xlu0 %976
          %978 = vrot.lane.b32.xlu0 %v931, 64
          %v979 = vpop.permute.xlu0 %978
          %980 = vrot.lane.b32.xlu0 %v933, 64
          %v981 = vpop.permute.xlu0 %980
          %982 = vrot.lane.b32.xlu0 %v935, 64
          %v983 = vpop.permute.xlu0 %982
          %984 = vrot.lane.b32.xlu0 %v937, 64
          %v985 = vpop.permute.xlu0 %984
          %986 = vrot.lane.b32.xlu0 %v939, 64
          %v987 = vpop.permute.xlu0 %986
          %988 = vrot.lane.b32.xlu0 %v941, 64
          %v989 = vpop.permute.xlu0 %988
          %990 = vrot.lane.b32.xlu0 %v943, 64
          %v991 = vpop.permute.xlu0 %990
          %992 = vrot.lane.b32.xlu0 %v945, 64
          %v993 = vpop.permute.xlu0 %992
          %994 = vrot.lane.b32.xlu0 %v947, 64
          %v995 = vpop.permute.xlu0 %994
          %996 = vrot.lane.b32.xlu0 %v949, 64
          %v997 = vpop.permute.xlu0 %996
          %998 = vrot.lane.b32.xlu0 %v951, 64
          %v999 = vpop.permute.xlu0 %998
          %1000 = vrot.lane.b32.xlu0 %v953, 64
          %v1001 = vpop.permute.xlu0 %1000
          %1002 = vrot.lane.b32.xlu0 %v955, 64
          %v1003 = vpop.permute.xlu0 %1002
          %1004 = vrot.lane.b32.xlu0 %v957, 64
          %v1005 = vpop.permute.xlu0 %1004
          %v1022 = vsel %vm682, %v975, 0.0
          %1023 = vadd.xlane.f32.xlu0 %v1022
          %v1024 = vpop.xlane.xlu0 %1023
          %v1025 = vsel %vm682, %v977, 0.0
          %1026 = vadd.xlane.f32.xlu0 %v1025
          %v1027 = vpop.xlane.xlu0 %1026
          %v1028 = vsel %vm682, %v979, 0.0
          %1029 = vadd.xlane.f32.xlu0 %v1028
          %v1030 = vpop.xlane.xlu0 %1029
          %v1031 = vsel %vm682, %v981, 0.0
          %1032 = vadd.xlane.f32.xlu0 %v1031
          %v1033 = vpop.xlane.xlu0 %1032
          %v1034 = vsel %vm682, %v983, 0.0
          %1035 = vadd.xlane.f32.xlu0 %v1034
          %v1036 = vpop.xlane.xlu0 %1035
          %v1037 = vsel %vm682, %v985, 0.0
          %1038 = vadd.xlane.f32.xlu0 %v1037
          %v1039 = vpop.xlane.xlu0 %1038
          %v1040 = vsel %vm682, %v987, 0.0
          %1041 = vadd.xlane.f32.xlu0 %v1040
          %v1042 = vpop.xlane.xlu0 %1041
          %v1043 = vsel %vm682, %v989, 0.0
          %1044 = vadd.xlane.f32.xlu0 %v1043
          %v1045 = vpop.xlane.xlu0 %1044
          %v1046 = vsel %vm682, %v991, 0.0
          %1047 = vadd.xlane.f32.xlu0 %v1046
          %v1048 = vpop.xlane.xlu0 %1047
          %v1049 = vsel %vm682, %v993, 0.0
          %1050 = vadd.xlane.f32.xlu0 %v1049
          %v1051 = vpop.xlane.xlu0 %1050
          %v1052 = vsel %vm682, %v995, 0.0
          %1053 = vadd.xlane.f32.xlu0 %v1052
          %v1054 = vpop.xlane.xlu0 %1053
          %v1055 = vsel %vm682, %v997, 0.0
          %1056 = vadd.xlane.f32.xlu0 %v1055
          %v1057 = vpop.xlane.xlu0 %1056
          %v1058 = vsel %vm682, %v999, 0.0
          %1059 = vadd.xlane.f32.xlu0 %v1058
          %v1060 = vpop.xlane.xlu0 %1059
          %v1061 = vsel %vm682, %v1001, 0.0
          %1062 = vadd.xlane.f32.xlu0 %v1061
          %v1063 = vpop.xlane.xlu0 %1062
          %v1064 = vsel %vm682, %v1003, 0.0
          %1065 = vadd.xlane.f32.xlu0 %v1064
          %v1066 = vpop.xlane.xlu0 %1065
          %v1067 = vsel %vm682, %v1005, 0.0
          %1068 = vadd.xlane.f32.xlu0 %v1067
          %v1069 = vpop.xlane.xlu0 %1068
          %v1070 = vrcp.pop %v1024
          %v1071 = vmul.f32 %v1024, %v1070
          %v1072 = vsub.f32 1.0, %v1071
          %v1073 = vmul.f32 %v1070, %v1072
          %v1074 = vadd.f32 %v1070, %v1073
          %vm1075 = vweird.f32 %v1024
          %vm1076 = vweird.f32 %v1070
          %vm1077 = vmor %vm1075, %vm1076
          %v1078 = vsel %vm1077, %v1070, %v1074
          %v1079 = vand.u32 2147483647, %v1024
          %vm1080 = vcmp.eq.f32.partialorder %v1079, 8.507059e+37
          %v1081 = vand.u32 %v1024, 2147483648
          %v1082 = vor.u32 1.1754944e-38, %v1081
          %v1083 = vsel %vm1080, %v1082, %v1078
          %v1084 = vrcp.pop %v1027
          %v1085 = vmul.f32 %v1027, %v1084
          %v1086 = vsub.f32 1.0, %v1085
          %v1087 = vmul.f32 %v1084, %v1086
          %v1088 = vadd.f32 %v1084, %v1087
          %vm1089 = vweird.f32 %v1027
          %vm1090 = vweird.f32 %v1084
          %vm1091 = vmor %vm1089, %vm1090
          %v1092 = vsel %vm1091, %v1084, %v1088
          %v1093 = vand.u32 2147483647, %v1027
          %vm1094 = vcmp.eq.f32.partialorder %v1093, 8.507059e+37
          %v1095 = vand.u32 %v1027, 2147483648
          %v1096 = vor.u32 1.1754944e-38, %v1095
          %v1097 = vsel %vm1094, %v1096, %v1092
          %v1098 = vrcp.pop %v1030
          %v1099 = vmul.f32 %v1030, %v1098
          %v1100 = vsub.f32 1.0, %v1099
          %v1101 = vmul.f32 %v1098, %v1100
          %v1102 = vadd.f32 %v1098, %v1101
          %vm1103 = vweird.f32 %v1030
          %vm1104 = vweird.f32 %v1098
          %vm1105 = vmor %vm1103, %vm1104
          %v1106 = vsel %vm1105, %v1098, %v1102
          %v1107 = vand.u32 2147483647, %v1030
          %vm1108 = vcmp.eq.f32.partialorder %v1107, 8.507059e+37
          %v1109 = vand.u32 %v1030, 2147483648
          %v1110 = vor.u32 1.1754944e-38, %v1109
          %v1111 = vsel %vm1108, %v1110, %v1106
          %v1112 = vrcp.pop %v1033
          %v1113 = vmul.f32 %v1033, %v1112
          %v1114 = vsub.f32 1.0, %v1113
          %v1115 = vmul.f32 %v1112, %v1114
          %v1116 = vadd.f32 %v1112, %v1115
          %vm1117 = vweird.f32 %v1033
          %vm1118 = vweird.f32 %v1112
          %vm1119 = vmor %vm1117, %vm1118
          %v1120 = vsel %vm1119, %v1112, %v1116
          %v1121 = vand.u32 2147483647, %v1033
          %vm1122 = vcmp.eq.f32.partialorder %v1121, 8.507059e+37
          %v1123 = vand.u32 %v1033, 2147483648
          %v1124 = vor.u32 1.1754944e-38, %v1123
          %v1125 = vsel %vm1122, %v1124, %v1120
          %v1126 = vrcp.pop %v1036
          %v1127 = vmul.f32 %v1036, %v1126
          %v1128 = vsub.f32 1.0, %v1127
          %v1129 = vmul.f32 %v1126, %v1128
          %v1130 = vadd.f32 %v1126, %v1129
          %vm1131 = vweird.f32 %v1036
          %vm1132 = vweird.f32 %v1126
          %vm1133 = vmor %vm1131, %vm1132
          %v1134 = vsel %vm1133, %v1126, %v1130
          %v1135 = vand.u32 2147483647, %v1036
          %vm1136 = vcmp.eq.f32.partialorder %v1135, 8.507059e+37
          %v1137 = vand.u32 %v1036, 2147483648
          %v1138 = vor.u32 1.1754944e-38, %v1137
          %v1139 = vsel %vm1136, %v1138, %v1134
          %v1140 = vrcp.pop %v1039
          %v1141 = vmul.f32 %v1039, %v1140
          %v1142 = vsub.f32 1.0, %v1141
          %v1143 = vmul.f32 %v1140, %v1142
          %v1144 = vadd.f32 %v1140, %v1143
          %vm1145 = vweird.f32 %v1039
          %vm1146 = vweird.f32 %v1140
          %vm1147 = vmor %vm1145, %vm1146
          %v1148 = vsel %vm1147, %v1140, %v1144
          %v1149 = vand.u32 2147483647, %v1039
          %vm1150 = vcmp.eq.f32.partialorder %v1149, 8.507059e+37
          %v1151 = vand.u32 %v1039, 2147483648
          %v1152 = vor.u32 1.1754944e-38, %v1151
          %v1153 = vsel %vm1150, %v1152, %v1148
          %v1154 = vrcp.pop %v1042
          %v1155 = vmul.f32 %v1042, %v1154
          %v1156 = vsub.f32 1.0, %v1155
          %v1157 = vmul.f32 %v1154, %v1156
          %v1158 = vadd.f32 %v1154, %v1157
          %vm1159 = vweird.f32 %v1042
          %vm1160 = vweird.f32 %v1154
          %vm1161 = vmor %vm1159, %vm1160
          %v1162 = vsel %vm1161, %v1154, %v1158
          %v1163 = vand.u32 2147483647, %v1042
          %vm1164 = vcmp.eq.f32.partialorder %v1163, 8.507059e+37
          %v1165 = vand.u32 %v1042, 2147483648
          %v1166 = vor.u32 1.1754944e-38, %v1165
          %v1167 = vsel %vm1164, %v1166, %v1162
          %v1168 = vrcp.pop %v1045
          %v1169 = vmul.f32 %v1045, %v1168
          %v1170 = vsub.f32 1.0, %v1169
          %v1171 = vmul.f32 %v1168, %v1170
          %v1172 = vadd.f32 %v1168, %v1171
          %vm1173 = vweird.f32 %v1045
          %vm1174 = vweird.f32 %v1168
          %vm1175 = vmor %vm1173, %vm1174
          %v1176 = vsel %vm1175, %v1168, %v1172
          %v1177 = vand.u32 2147483647, %v1045
          %vm1178 = vcmp.eq.f32.partialorder %v1177, 8.507059e+37
          %v1179 = vand.u32 %v1045, 2147483648
          %v1180 = vor.u32 1.1754944e-38, %v1179
          %v1181 = vsel %vm1178, %v1180, %v1176
          %v1182 = vrcp.pop %v1048
          %v1183 = vmul.f32 %v1048, %v1182
          %v1184 = vsub.f32 1.0, %v1183
          %v1185 = vmul.f32 %v1182, %v1184
          %v1186 = vadd.f32 %v1182, %v1185
          %vm1187 = vweird.f32 %v1048
          %vm1188 = vweird.f32 %v1182
          %vm1189 = vmor %vm1187, %vm1188
          %v1190 = vsel %vm1189, %v1182, %v1186
          %v1191 = vand.u32 2147483647, %v1048
          %vm1192 = vcmp.eq.f32.partialorder %v1191, 8.507059e+37
          %v1193 = vand.u32 %v1048, 2147483648
          %v1194 = vor.u32 1.1754944e-38, %v1193
          %v1195 = vsel %vm1192, %v1194, %v1190
          %v1196 = vrcp.pop %v1051
          %v1197 = vmul.f32 %v1051, %v1196
          %v1198 = vsub.f32 1.0, %v1197
          %v1199 = vmul.f32 %v1196, %v1198
          %v1200 = vadd.f32 %v1196, %v1199
          %vm1201 = vweird.f32 %v1051
          %vm1202 = vweird.f32 %v1196
          %vm1203 = vmor %vm1201, %vm1202
          %v1204 = vsel %vm1203, %v1196, %v1200
          %v1205 = vand.u32 2147483647, %v1051
          %vm1206 = vcmp.eq.f32.partialorder %v1205, 8.507059e+37
          %v1207 = vand.u32 %v1051, 2147483648
          %v1208 = vor.u32 1.1754944e-38, %v1207
          %v1209 = vsel %vm1206, %v1208, %v1204
          %v1210 = vrcp.pop %v1054
          %v1211 = vmul.f32 %v1054, %v1210
          %v1212 = vsub.f32 1.0, %v1211
          %v1213 = vmul.f32 %v1210, %v1212
          %v1214 = vadd.f32 %v1210, %v1213
          %vm1215 = vweird.f32 %v1054
          %vm1216 = vweird.f32 %v1210
          %vm1217 = vmor %vm1215, %vm1216
          %v1218 = vsel %vm1217, %v1210, %v1214
          %v1219 = vand.u32 2147483647, %v1054
          %vm1220 = vcmp.eq.f32.partialorder %v1219, 8.507059e+37
          %v1221 = vand.u32 %v1054, 2147483648
          %v1222 = vor.u32 1.1754944e-38, %v1221
          %v1223 = vsel %vm1220, %v1222, %v1218
          %v1224 = vrcp.pop %v1057
          %v1225 = vmul.f32 %v1057, %v1224
          %v1226 = vsub.f32 1.0, %v1225
          %v1227 = vmul.f32 %v1224, %v1226
          %v1228 = vadd.f32 %v1224, %v1227
          %vm1229 = vweird.f32 %v1057
          %vm1230 = vweird.f32 %v1224
          %vm1231 = vmor %vm1229, %vm1230
          %v1232 = vsel %vm1231, %v1224, %v1228
          %v1233 = vand.u32 2147483647, %v1057
          %vm1234 = vcmp.eq.f32.partialorder %v1233, 8.507059e+37
          %v1235 = vand.u32 %v1057, 2147483648
          %v1236 = vor.u32 1.1754944e-38, %v1235
          %v1237 = vsel %vm1234, %v1236, %v1232
          %v1238 = vrcp.pop %v1060
          %v1239 = vmul.f32 %v1060, %v1238
          %v1240 = vsub.f32 1.0, %v1239
          %v1241 = vmul.f32 %v1238, %v1240
          %v1242 = vadd.f32 %v1238, %v1241
          %vm1243 = vweird.f32 %v1060
          %vm1244 = vweird.f32 %v1238
          %vm1245 = vmor %vm1243, %vm1244
          %v1246 = vsel %vm1245, %v1238, %v1242
          %v1247 = vand.u32 2147483647, %v1060
          %vm1248 = vcmp.eq.f32.partialorder %v1247, 8.507059e+37
          %v1249 = vand.u32 %v1060, 2147483648
          %v1250 = vor.u32 1.1754944e-38, %v1249
          %v1251 = vsel %vm1248, %v1250, %v1246
          %v1252 = vrcp.pop %v1063
          %v1253 = vmul.f32 %v1063, %v1252
          %v1254 = vsub.f32 1.0, %v1253
          %v1255 = vmul.f32 %v1252, %v1254
          %v1256 = vadd.f32 %v1252, %v1255
          %vm1257 = vweird.f32 %v1063
          %vm1258 = vweird.f32 %v1252
          %vm1259 = vmor %vm1257, %vm1258
          %v1260 = vsel %vm1259, %v1252, %v1256
          %v1261 = vand.u32 2147483647, %v1063
          %vm1262 = vcmp.eq.f32.partialorder %v1261, 8.507059e+37
          %v1263 = vand.u32 %v1063, 2147483648
          %v1264 = vor.u32 1.1754944e-38, %v1263
          %v1265 = vsel %vm1262, %v1264, %v1260
          %v1266 = vrcp.pop %v1066
          %v1267 = vmul.f32 %v1066, %v1266
          %v1268 = vsub.f32 1.0, %v1267
          %v1269 = vmul.f32 %v1266, %v1268
          %v1270 = vadd.f32 %v1266, %v1269
          %vm1271 = vweird.f32 %v1066
          %vm1272 = vweird.f32 %v1266
          %vm1273 = vmor %vm1271, %vm1272
          %v1274 = vsel %vm1273, %v1266, %v1270
          %v1275 = vand.u32 2147483647, %v1066
          %vm1276 = vcmp.eq.f32.partialorder %v1275, 8.507059e+37
          %v1277 = vand.u32 %v1066, 2147483648
          %v1278 = vor.u32 1.1754944e-38, %v1277
          %v1279 = vsel %vm1276, %v1278, %v1274
          %v1280 = vrcp.pop %v1069
          %v1281 = vmul.f32 %v1069, %v1280
          %v1282 = vsub.f32 1.0, %v1281
          %v1283 = vmul.f32 %v1280, %v1282
          %v1284 = vadd.f32 %v1280, %v1283
          %vm1285 = vweird.f32 %v1069
          %vm1286 = vweird.f32 %v1280
          %vm1287 = vmor %vm1285, %vm1286
          %v1288 = vsel %vm1287, %v1280, %v1284
          %v1289 = vand.u32 2147483647, %v1069
          %vm1290 = vcmp.eq.f32.partialorder %v1289, 8.507059e+37
          %v1291 = vand.u32 %v1069, 2147483648
          %v1292 = vor.u32 1.1754944e-38, %v1291
          %v1293 = vsel %vm1290, %v1292, %v1288
          %v1294 = vmul.f32 %v927, %v1083
          %v1295 = vmul.f32 %v929, %v1097
          %v1296 = vmul.f32 %v931, %v1111
          %v1297 = vmul.f32 %v933, %v1125
          %v1298 = vmul.f32 %v935, %v1139
          %v1299 = vmul.f32 %v937, %v1153
          %v1300 = vmul.f32 %v939, %v1167
          %v1301 = vmul.f32 %v941, %v1181
          %v1302 = vmul.f32 %v943, %v1195
          %v1303 = vmul.f32 %v945, %v1209
          %v1304 = vmul.f32 %v947, %v1223
          %v1305 = vmul.f32 %v949, %v1237
          %v1306 = vmul.f32 %v951, %v1251
          %v1307 = vmul.f32 %v953, %v1265
          %v1308 = vmul.f32 %v955, %v1279
          %v1309 = vmul.f32 %v957, %v1293
          %v1311 = vrot.slane %v723, 1
          %v1312 = vperm.slane %v723, 0
          %v1313 = vperm.slane %v1311, 0
          %1314 = vrot.lane.b32.xlu0 %v1312, 64
          %v1315 = vpop.permute.xlu0 %1314
          %1316 = vrot.lane.b32.xlu0 %v1313, 64
          %v1317 = vpop.permute.xlu0 %1316
          %v1320 = vmul.f32 %v1294, %v1315
          %v1321 = vmul.f32 %v1295, %v1315
          %v1322 = vmul.f32 %v1296, %v1315
          %v1323 = vmul.f32 %v1297, %v1315
          %v1324 = vmul.f32 %v1298, %v1315
          %v1325 = vmul.f32 %v1299, %v1315
          %v1326 = vmul.f32 %v1300, %v1315
          %v1327 = vmul.f32 %v1301, %v1315
          %v1328 = vmul.f32 %v1302, %v1317
          %v1329 = vmul.f32 %v1303, %v1317
          %v1330 = vmul.f32 %v1304, %v1317
          %v1331 = vmul.f32 %v1305, %v1317
          %v1332 = vmul.f32 %v1306, %v1317
          %v1333 = vmul.f32 %v1307, %v1317
          %v1334 = vmul.f32 %v1308, %v1317
          %v1335 = vmul.f32 %v1309, %v1317
          %1352 = vrot.lane.b32.xlu0 %v1320, 64
          %v1353 = vpop.permute.xlu0 %1352
          %1354 = vrot.lane.b32.xlu0 %v1321, 64
          %v1355 = vpop.permute.xlu0 %1354
          %1356 = vrot.lane.b32.xlu0 %v1322, 64
          %v1357 = vpop.permute.xlu0 %1356
          %1358 = vrot.lane.b32.xlu0 %v1323, 64
          %v1359 = vpop.permute.xlu0 %1358
          %1360 = vrot.lane.b32.xlu0 %v1324, 64
          %v1361 = vpop.permute.xlu0 %1360
          %1362 = vrot.lane.b32.xlu0 %v1325, 64
          %v1363 = vpop.permute.xlu0 %1362
          %1364 = vrot.lane.b32.xlu0 %v1326, 64
          %v1365 = vpop.permute.xlu0 %1364
          %1366 = vrot.lane.b32.xlu0 %v1327, 64
          %v1367 = vpop.permute.xlu0 %1366
          %1368 = vrot.lane.b32.xlu0 %v1328, 64
          %v1369 = vpop.permute.xlu0 %1368
          %1370 = vrot.lane.b32.xlu0 %v1329, 64
          %v1371 = vpop.permute.xlu0 %1370
          %1372 = vrot.lane.b32.xlu0 %v1330, 64
          %v1373 = vpop.permute.xlu0 %1372
          %1374 = vrot.lane.b32.xlu0 %v1331, 64
          %v1375 = vpop.permute.xlu0 %1374
          %1376 = vrot.lane.b32.xlu0 %v1332, 64
          %v1377 = vpop.permute.xlu0 %1376
          %1378 = vrot.lane.b32.xlu0 %v1333, 64
          %v1379 = vpop.permute.xlu0 %1378
          %1380 = vrot.lane.b32.xlu0 %v1334, 64
          %v1381 = vpop.permute.xlu0 %1380
          %1382 = vrot.lane.b32.xlu0 %v1335, 64
          %v1383 = vpop.permute.xlu0 %1382
          %v1400 = vsel %vm682, %v1353, 0.0
          %1401 = vadd.xlane.f32.xlu0 %v1400
          %v1402 = vpop.xlane.xlu0 %1401
          %v1403 = vsel %vm682, %v1355, 0.0
          %1404 = vadd.xlane.f32.xlu0 %v1403
          %v1405 = vpop.xlane.xlu0 %1404
          %v1406 = vsel %vm682, %v1357, 0.0
          %1407 = vadd.xlane.f32.xlu0 %v1406
          %v1408 = vpop.xlane.xlu0 %1407
          %v1409 = vsel %vm682, %v1359, 0.0
          %1410 = vadd.xlane.f32.xlu0 %v1409
          %v1411 = vpop.xlane.xlu0 %1410
          %v1412 = vsel %vm682, %v1361, 0.0
          %1413 = vadd.xlane.f32.xlu0 %v1412
          %v1414 = vpop.xlane.xlu0 %1413
          %v1415 = vsel %vm682, %v1363, 0.0
          %1416 = vadd.xlane.f32.xlu0 %v1415
          %v1417 = vpop.xlane.xlu0 %1416
          %v1418 = vsel %vm682, %v1365, 0.0
          %1419 = vadd.xlane.f32.xlu0 %v1418
          %v1420 = vpop.xlane.xlu0 %1419
          %v1421 = vsel %vm682, %v1367, 0.0
          %1422 = vadd.xlane.f32.xlu0 %v1421
          %v1423 = vpop.xlane.xlu0 %1422
          %v1424 = vsel %vm682, %v1369, 0.0
          %1425 = vadd.xlane.f32.xlu0 %v1424
          %v1426 = vpop.xlane.xlu0 %1425
          %v1427 = vsel %vm682, %v1371, 0.0
          %1428 = vadd.xlane.f32.xlu0 %v1427
          %v1429 = vpop.xlane.xlu0 %1428
          %v1430 = vsel %vm682, %v1373, 0.0
          %1431 = vadd.xlane.f32.xlu0 %v1430
          %v1432 = vpop.xlane.xlu0 %1431
          %v1433 = vsel %vm682, %v1375, 0.0
          %1434 = vadd.xlane.f32.xlu0 %v1433
          %v1435 = vpop.xlane.xlu0 %1434
          %v1436 = vsel %vm682, %v1377, 0.0
          %1437 = vadd.xlane.f32.xlu0 %v1436
          %v1438 = vpop.xlane.xlu0 %1437
          %v1439 = vsel %vm682, %v1379, 0.0
          %1440 = vadd.xlane.f32.xlu0 %v1439
          %v1441 = vpop.xlane.xlu0 %1440
          %v1442 = vsel %vm682, %v1381, 0.0
          %1443 = vadd.xlane.f32.xlu0 %v1442
          %v1444 = vpop.xlane.xlu0 %1443
          %v1445 = vsel %vm682, %v1383, 0.0
          %1446 = vadd.xlane.f32.xlu0 %v1445
          %v1447 = vpop.xlane.xlu0 %1446
          %v1448 = vadd.f32 %v1402, %v579
          %v1449 = vadd.f32 %v1405, %v580
          %v1450 = vadd.f32 %v1408, %v581
          %v1451 = vadd.f32 %v1411, %v582
          %v1452 = vadd.f32 %v1414, %v583
          %v1453 = vadd.f32 %v1417, %v584
          %v1454 = vadd.f32 %v1420, %v585
          %v1455 = vadd.f32 %v1423, %v586
          %v1456 = vadd.f32 %v1426, %v587
          %v1457 = vadd.f32 %v1429, %v588
          %v1458 = vadd.f32 %v1432, %v589
          %v1459 = vadd.f32 %v1435, %v590
          %v1460 = vadd.f32 %v1438, %v591
          %v1461 = vadd.f32 %v1441, %v592
          %v1462 = vadd.f32 %v1444, %v593
          %v1463 = vadd.f32 %v1447, %v594
          %v1480 = vperm.slane %v1448, %v635
          %v1481 = vperm.slane %v1449, %v637
          %v1482 = vsel %vm639, %v1481, %v1480
          %v1483 = vperm.slane %v1450, %v641
          %v1484 = vsel %vm643, %v1483, %v1482
          %v1485 = vperm.slane %v1451, %v645
          %v1486 = vsel %vm647, %v1485, %v1484
          %v1487 = vperm.slane %v1452, %v649
          %v1488 = vsel %vm651, %v1487, %v1486
          %v1489 = vperm.slane %v1453, %v653
          %v1490 = vsel %vm655, %v1489, %v1488
          %v1491 = vperm.slane %v1454, %v657
          %v1492 = vsel %vm659, %v1491, %v1490
          %v1493 = vperm.slane %v1455, %v661
          %v1494 = vsel %vm663, %v1493, %v1492
          %v1495 = vperm.slane %v1456, %v635
          %v1496 = vperm.slane %v1457, %v637
          %v1497 = vsel %vm639, %v1496, %v1495
          %v1498 = vperm.slane %v1458, %v641
          %v1499 = vsel %vm643, %v1498, %v1497
          %v1500 = vperm.slane %v1459, %v645
          %v1501 = vsel %vm647, %v1500, %v1499
          %v1502 = vperm.slane %v1460, %v649
          %v1503 = vsel %vm651, %v1502, %v1501
          %v1504 = vperm.slane %v1461, %v653
          %v1505 = vsel %vm655, %v1504, %v1503
          %v1506 = vperm.slane %v1462, %v657
          %v1507 = vsel %vm659, %v1506, %v1505
          %v1508 = vperm.slane %v1463, %v661
          %v1509 = vsel %vm663, %v1508, %v1507
          %v1510 = vsel %vm680, %v1509, %v1494
          %vm1512 = vcmask 517120
          %v1513 = vsel %vm1512, %v1510, 0.0
          %1514 = vadd.xlane.f32.xlu0 %v1513
          %v1515 = vpop.xlane.xlu0 %1514
          %v1516 = vrcp.pop 64.0
          %v1517 = vmul.f32 64.0, %v1516
          %v1518 = vsub.f32 1.0, %v1517
          %v1519 = vmul.f32 %v1516, %v1518
          %v1520 = vadd.f32 %v1516, %v1519
          %vm1521 = vweird.f32 %v1516
          %v1522 = vsel %vm1521, %v1516, %v1520
          %v1523 = vmul.f32 %v1515, %v1522
          %v1525 = vperm.slane %v1523, 0
          %v1526 = vperm.slane %v1523, 1
          %v1529 = vsub.f32 %v1448, %v1525
          %v1530 = vsub.f32 %v1449, %v1525
          %v1531 = vsub.f32 %v1450, %v1525
          %v1532 = vsub.f32 %v1451, %v1525
          %v1533 = vsub.f32 %v1452, %v1525
          %v1534 = vsub.f32 %v1453, %v1525
          %v1535 = vsub.f32 %v1454, %v1525
          %v1536 = vsub.f32 %v1455, %v1525
          %v1537 = vsub.f32 %v1456, %v1526
          %v1538 = vsub.f32 %v1457, %v1526
          %v1539 = vsub.f32 %v1458, %v1526
          %v1540 = vsub.f32 %v1459, %v1526
          %v1541 = vsub.f32 %v1460, %v1526
          %v1542 = vsub.f32 %v1461, %v1526
          %v1543 = vsub.f32 %v1462, %v1526
          %v1544 = vsub.f32 %v1463, %v1526
          %v1545 = vmul.f32 %v1529, %v1529
          %v1546 = vmul.f32 %v1530, %v1530
          %v1547 = vmul.f32 %v1531, %v1531
          %v1548 = vmul.f32 %v1532, %v1532
          %v1549 = vmul.f32 %v1533, %v1533
          %v1550 = vmul.f32 %v1534, %v1534
          %v1551 = vmul.f32 %v1535, %v1535
          %v1552 = vmul.f32 %v1536, %v1536
          %v1553 = vmul.f32 %v1537, %v1537
          %v1554 = vmul.f32 %v1538, %v1538
          %v1555 = vmul.f32 %v1539, %v1539
          %v1556 = vmul.f32 %v1540, %v1540
          %v1557 = vmul.f32 %v1541, %v1541
          %v1558 = vmul.f32 %v1542, %v1542
          %v1559 = vmul.f32 %v1543, %v1543
          %v1560 = vmul.f32 %v1544, %v1544
          %1577 = vset.pattern.permute.xlu0 0
          %1578 = vperm.xlu0 %1577, %v1545
          %v1579 = vpop.permute.xlu0 %1578
          %1580 = vset.pattern.permute.xlu0 0
          %1581 = vperm.xlu0 %1580, %v1546
          %v1582 = vpop.permute.xlu0 %1581
          %1583 = vset.pattern.permute.xlu0 0
          %1584 = vperm.xlu0 %1583, %v1547
          %v1585 = vpop.permute.xlu0 %1584
          %1586 = vset.pattern.permute.xlu0 0
          %1587 = vperm.xlu0 %1586, %v1548
          %v1588 = vpop.permute.xlu0 %1587
          %1589 = vset.pattern.permute.xlu0 0
          %1590 = vperm.xlu0 %1589, %v1549
          %v1591 = vpop.permute.xlu0 %1590
          %1592 = vset.pattern.permute.xlu0 0
          %1593 = vperm.xlu0 %1592, %v1550
          %v1594 = vpop.permute.xlu0 %1593
          %1595 = vset.pattern.permute.xlu0 0
          %1596 = vperm.xlu0 %1595, %v1551
          %v1597 = vpop.permute.xlu0 %1596
          %1598 = vset.pattern.permute.xlu0 0
          %1599 = vperm.xlu0 %1598, %v1552
          %v1600 = vpop.permute.xlu0 %1599
          %1601 = vset.pattern.permute.xlu0 0
          %1602 = vperm.xlu0 %1601, %v1553
          %v1603 = vpop.permute.xlu0 %1602
          %1604 = vset.pattern.permute.xlu0 0
          %1605 = vperm.xlu0 %1604, %v1554
          %v1606 = vpop.permute.xlu0 %1605
          %1607 = vset.pattern.permute.xlu0 0
          %1608 = vperm.xlu0 %1607, %v1555
          %v1609 = vpop.permute.xlu0 %1608
          %1610 = vset.pattern.permute.xlu0 0
          %1611 = vperm.xlu0 %1610, %v1556
          %v1612 = vpop.permute.xlu0 %1611
          %1613 = vset.pattern.permute.xlu0 0
          %1614 = vperm.xlu0 %1613, %v1557
          %v1615 = vpop.permute.xlu0 %1614
          %1616 = vset.pattern.permute.xlu0 0
          %1617 = vperm.xlu0 %1616, %v1558
          %v1618 = vpop.permute.xlu0 %1617
          %1619 = vset.pattern.permute.xlu0 0
          %1620 = vperm.xlu0 %1619, %v1559
          %v1621 = vpop.permute.xlu0 %1620
          %1622 = vset.pattern.permute.xlu0 0
          %1623 = vperm.xlu0 %1622, %v1560
          %v1624 = vpop.permute.xlu0 %1623
          %v1625 = vperm.slane %v1579, %v635
          %v1626 = vperm.slane %v1582, %v637
          %v1627 = vsel %vm639, %v1626, %v1625
          %v1628 = vperm.slane %v1585, %v641
          %v1629 = vsel %vm643, %v1628, %v1627
          %v1630 = vperm.slane %v1588, %v645
          %v1631 = vsel %vm647, %v1630, %v1629
          %v1632 = vperm.slane %v1591, %v649
          %v1633 = vsel %vm651, %v1632, %v1631
          %v1634 = vperm.slane %v1594, %v653
          %v1635 = vsel %vm655, %v1634, %v1633
          %v1636 = vperm.slane %v1597, %v657
          %v1637 = vsel %vm659, %v1636, %v1635
          %v1638 = vperm.slane %v1600, %v661
          %v1639 = vsel %vm663, %v1638, %v1637
          %v1640 = vperm.slane %v1603, %v635
          %v1641 = vperm.slane %v1606, %v637
          %v1642 = vsel %vm639, %v1641, %v1640
          %v1643 = vperm.slane %v1609, %v641
          %v1644 = vsel %vm643, %v1643, %v1642
          %v1645 = vperm.slane %v1612, %v645
          %v1646 = vsel %vm647, %v1645, %v1644
          %v1647 = vperm.slane %v1615, %v649
          %v1648 = vsel %vm651, %v1647, %v1646
          %v1649 = vperm.slane %v1618, %v653
          %v1650 = vsel %vm655, %v1649, %v1648
          %v1651 = vperm.slane %v1621, %v657
          %v1652 = vsel %vm659, %v1651, %v1650
          %v1653 = vperm.slane %v1624, %v661
          %v1654 = vsel %vm663, %v1653, %v1652
          %v1655 = vsel %vm680, %v1654, %v1639
          %v1657 = vsel %vm1512, %v1655, 0.0
          %1658 = vadd.xlane.f32.xlu0 %v1657
          %v1659 = vpop.xlane.xlu0 %1658
          %v1660 = vmul.f32 %v1659, %v1522
          %v1661 = vadd.f32 %v1660, 1e-05
          %v1662 = vrsqrt.pop %v1661
          %v1663 = vmul.f32 %v1662, %v1661
          %v1664 = vmul.f32 %v1663, %v1662
          %v1665 = vmul.f32 0.5, %v1664
          %v1666 = vsub.f32 1.5, %v1665
          %v1667 = vmul.f32 %v1662, %v1666
          %vm1668 = vweird.f32 %v1661
          %vm1669 = vweird.f32 %v1662
          %vm1670 = vmor %vm1668, %vm1669
          %v1671 = vsel %vm1670, %v1662, %v1667
          %v1673 = vperm.slane %v1671, 0
          %v1674 = vperm.slane %v1671, 1
          %v1677 = vmul.f32 %v1529, %v1673
          %v1678 = vmul.f32 %v1530, %v1673
          %v1679 = vmul.f32 %v1531, %v1673
          %v1680 = vmul.f32 %v1532, %v1673
          %v1681 = vmul.f32 %v1533, %v1673
          %v1682 = vmul.f32 %v1534, %v1673
          %v1683 = vmul.f32 %v1535, %v1673
          %v1684 = vmul.f32 %v1536, %v1673
          %v1685 = vmul.f32 %v1537, %v1674
          %v1686 = vmul.f32 %v1538, %v1674
          %v1687 = vmul.f32 %v1539, %v1674
          %v1688 = vmul.f32 %v1540, %v1674
          %v1689 = vmul.f32 %v1541, %v1674
          %v1690 = vmul.f32 %v1542, %v1674
          %v1691 = vmul.f32 %v1543, %v1674
          %v1692 = vmul.f32 %v1544, %v1674
          %v1693 = vperm.slane %v595, 2
          %v1695 = vlaneseq
          %v1696 = vshrl.u32 %v1695, 7
          %1698 = vset.pattern.permute.xlu0 %v1696
          %1699 = vperm.xlu0 %1698, %v1693
          %v1700 = vpop.permute.xlu0 %1699
          %v1701 = vlaneseq
          %v1702 = vshrl.u32 %v1701, 7
          %v1703 = vadd.s32 %v1702, 8
          %1704 = vset.pattern.permute.xlu0 %v1703
          %1705 = vperm.xlu0 %1704, %v1693
          %v1706 = vpop.permute.xlu0 %1705
          %v1707 = vlaneseq
          %v1708 = vshrl.u32 %v1707, 7
          %v1709 = vadd.s32 %v1708, 16
          %1710 = vset.pattern.permute.xlu0 %v1709
          %1711 = vperm.xlu0 %1710, %v1693
          %v1712 = vpop.permute.xlu0 %1711
          %v1713 = vlaneseq
          %v1714 = vshrl.u32 %v1713, 7
          %v1715 = vadd.s32 %v1714, 24
          %1716 = vset.pattern.permute.xlu0 %v1715
          %1717 = vperm.xlu0 %1716, %v1693
          %v1718 = vpop.permute.xlu0 %1717
          %v1719 = vlaneseq
          %v1720 = vshrl.u32 %v1719, 7
          %v1721 = vadd.s32 %v1720, 32
          %1722 = vset.pattern.permute.xlu0 %v1721
          %1723 = vperm.xlu0 %1722, %v1693
          %v1724 = vpop.permute.xlu0 %1723
          %v1725 = vlaneseq
          %v1726 = vshrl.u32 %v1725, 7
          %v1727 = vadd.s32 %v1726, 40
          %1728 = vset.pattern.permute.xlu0 %v1727
          %1729 = vperm.xlu0 %1728, %v1693
          %v1730 = vpop.permute.xlu0 %1729
          %v1731 = vlaneseq
          %v1732 = vshrl.u32 %v1731, 7
          %v1733 = vadd.s32 %v1732, 48
          %1734 = vset.pattern.permute.xlu0 %v1733
          %1735 = vperm.xlu0 %1734, %v1693
          %v1736 = vpop.permute.xlu0 %1735
          %v1737 = vlaneseq
          %v1738 = vshrl.u32 %v1737, 7
          %v1739 = vadd.s32 %v1738, 56
          %1740 = vset.pattern.permute.xlu0 %v1739
          %1741 = vperm.xlu0 %1740, %v1693
          %v1742 = vpop.permute.xlu0 %1741
          %v1751 = vmul.f32 %v1677, %v1700
          %v1752 = vmul.f32 %v1678, %v1706
          %v1753 = vmul.f32 %v1679, %v1712
          %v1754 = vmul.f32 %v1680, %v1718
          %v1755 = vmul.f32 %v1681, %v1724
          %v1756 = vmul.f32 %v1682, %v1730
          %v1757 = vmul.f32 %v1683, %v1736
          %v1758 = vmul.f32 %v1684, %v1742
          %v1759 = vmul.f32 %v1685, %v1700
          %v1760 = vmul.f32 %v1686, %v1706
          %v1761 = vmul.f32 %v1687, %v1712
          %v1762 = vmul.f32 %v1688, %v1718
          %v1763 = vmul.f32 %v1689, %v1724
          %v1764 = vmul.f32 %v1690, %v1730
          %v1765 = vmul.f32 %v1691, %v1736
          %v1766 = vmul.f32 %v1692, %v1742
          %v1767 = vperm.slane %v595, 3
          %v1769 = vlaneseq
          %v1770 = vshrl.u32 %v1769, 7
          %1772 = vset.pattern.permute.xlu0 %v1770
          %1773 = vperm.xlu0 %1772, %v1767
          %v1774 = vpop.permute.xlu0 %1773
          %v1775 = vlaneseq
          %v1776 = vshrl.u32 %v1775, 7
          %v1777 = vadd.s32 %v1776, 8
          %1778 = vset.pattern.permute.xlu0 %v1777
          %1779 = vperm.xlu0 %1778, %v1767
          %v1780 = vpop.permute.xlu0 %1779
          %v1781 = vlaneseq
          %v1782 = vshrl.u32 %v1781, 7
          %v1783 = vadd.s32 %v1782, 16
          %1784 = vset.pattern.permute.xlu0 %v1783
          %1785 = vperm.xlu0 %1784, %v1767
          %v1786 = vpop.permute.xlu0 %1785
          %v1787 = vlaneseq
          %v1788 = vshrl.u32 %v1787, 7
          %v1789 = vadd.s32 %v1788, 24
          %1790 = vset.pattern.permute.xlu0 %v1789
          %1791 = vperm.xlu0 %1790, %v1767
          %v1792 = vpop.permute.xlu0 %1791
          %v1793 = vlaneseq
          %v1794 = vshrl.u32 %v1793, 7
          %v1795 = vadd.s32 %v1794, 32
          %1796 = vset.pattern.permute.xlu0 %v1795
          %1797 = vperm.xlu0 %1796, %v1767
          %v1798 = vpop.permute.xlu0 %1797
          %v1799 = vlaneseq
          %v1800 = vshrl.u32 %v1799, 7
          %v1801 = vadd.s32 %v1800, 40
          %1802 = vset.pattern.permute.xlu0 %v1801
          %1803 = vperm.xlu0 %1802, %v1767
          %v1804 = vpop.permute.xlu0 %1803
          %v1805 = vlaneseq
          %v1806 = vshrl.u32 %v1805, 7
          %v1807 = vadd.s32 %v1806, 48
          %1808 = vset.pattern.permute.xlu0 %v1807
          %1809 = vperm.xlu0 %1808, %v1767
          %v1810 = vpop.permute.xlu0 %1809
          %v1811 = vlaneseq
          %v1812 = vshrl.u32 %v1811, 7
          %v1813 = vadd.s32 %v1812, 56
          %1814 = vset.pattern.permute.xlu0 %v1813
          %1815 = vperm.xlu0 %1814, %v1767
          %v1816 = vpop.permute.xlu0 %1815
          %v1825 = vadd.f32 %v1751, %v1774
          %v1826 = vadd.f32 %v1752, %v1780
          %v1827 = vadd.f32 %v1753, %v1786
          %v1828 = vadd.f32 %v1754, %v1792
          %v1829 = vadd.f32 %v1755, %v1798
          %v1830 = vadd.f32 %v1756, %v1804
          %v1831 = vadd.f32 %v1757, %v1810
          %v1832 = vadd.f32 %v1758, %v1816
          %v1833 = vadd.f32 %v1759, %v1774
          %v1834 = vadd.f32 %v1760, %v1780
          %v1835 = vadd.f32 %v1761, %v1786
          %v1836 = vadd.f32 %v1762, %v1792
          %v1837 = vadd.f32 %v1763, %v1798
          %v1838 = vadd.f32 %v1764, %v1804
          %v1839 = vadd.f32 %v1765, %v1810
          %v1840 = vadd.f32 %v1766, %v1816
          %v1841 = vld [vmem:[%s3] sm:$0xff]
          %v1842 = vld [vmem:[%s3 + $0x8] sm:$0xff]
          %v1843 = vld [vmem:[%s3 + $0x10] sm:$0xff]
          %v1844 = vld [vmem:[%s3 + $0x18] sm:$0xff]
          %v1845 = vld [vmem:[%s3 + $0x20] sm:$0xff]
          %v1846 = vld [vmem:[%s3 + $0x28] sm:$0xff]
          %v1847 = vld [vmem:[%s3 + $0x30] sm:$0xff]
          %v1848 = vld [vmem:[%s3 + $0x38] sm:$0xff]
          %v1849 = vperm.slane %v595, 0
          %1866 = vset.pattern.permute.xlu0 0
          %1867 = vperm.xlu0 %1866, %v1825
          %v1868 = vpop.permute.xlu0 %1867
          %1869 = vset.pattern.permute.xlu0 0
          %1870 = vperm.xlu0 %1869, %v1826
          %v1871 = vpop.permute.xlu0 %1870
          %1872 = vset.pattern.permute.xlu0 0
          %1873 = vperm.xlu0 %1872, %v1827
          %v1874 = vpop.permute.xlu0 %1873
          %1875 = vset.pattern.permute.xlu0 0
          %1876 = vperm.xlu0 %1875, %v1828
          %v1877 = vpop.permute.xlu0 %1876
          %1878 = vset.pattern.permute.xlu0 0
          %1879 = vperm.xlu0 %1878, %v1829
          %v1880 = vpop.permute.xlu0 %1879
          %1881 = vset.pattern.permute.xlu0 0
          %1882 = vperm.xlu0 %1881, %v1830
          %v1883 = vpop.permute.xlu0 %1882
          %1884 = vset.pattern.permute.xlu0 0
          %1885 = vperm.xlu0 %1884, %v1831
          %v1886 = vpop.permute.xlu0 %1885
          %1887 = vset.pattern.permute.xlu0 0
          %1888 = vperm.xlu0 %1887, %v1832
          %v1889 = vpop.permute.xlu0 %1888
          %1890 = vset.pattern.permute.xlu0 0
          %1891 = vperm.xlu0 %1890, %v1833
          %v1892 = vpop.permute.xlu0 %1891
          %1893 = vset.pattern.permute.xlu0 0
          %1894 = vperm.xlu0 %1893, %v1834
          %v1895 = vpop.permute.xlu0 %1894
          %1896 = vset.pattern.permute.xlu0 0
          %1897 = vperm.xlu0 %1896, %v1835
          %v1898 = vpop.permute.xlu0 %1897
          %1899 = vset.pattern.permute.xlu0 0
          %1900 = vperm.xlu0 %1899, %v1836
          %v1901 = vpop.permute.xlu0 %1900
          %1902 = vset.pattern.permute.xlu0 0
          %1903 = vperm.xlu0 %1902, %v1837
          %v1904 = vpop.permute.xlu0 %1903
          %1905 = vset.pattern.permute.xlu0 0
          %1906 = vperm.xlu0 %1905, %v1838
          %v1907 = vpop.permute.xlu0 %1906
          %1908 = vset.pattern.permute.xlu0 0
          %1909 = vperm.xlu0 %1908, %v1839
          %v1910 = vpop.permute.xlu0 %1909
          %1911 = vset.pattern.permute.xlu0 0
          %1912 = vperm.xlu0 %1911, %v1840
          %v1913 = vpop.permute.xlu0 %1912
          %v1914 = vperm.slane %v1868, %v635
          %v1915 = vperm.slane %v1871, %v637
          %v1916 = vsel %vm639, %v1915, %v1914
          %v1917 = vperm.slane %v1874, %v641
          %v1918 = vsel %vm643, %v1917, %v1916
          %v1919 = vperm.slane %v1877, %v645
          %v1920 = vsel %vm647, %v1919, %v1918
          %v1921 = vperm.slane %v1880, %v649
          %v1922 = vsel %vm651, %v1921, %v1920
          %v1923 = vperm.slane %v1883, %v653
          %v1924 = vsel %vm655, %v1923, %v1922
          %v1925 = vperm.slane %v1886, %v657
          %v1926 = vsel %vm659, %v1925, %v1924
          %v1927 = vperm.slane %v1889, %v661
          %v1928 = vsel %vm663, %v1927, %v1926
          %v1929 = vperm.slane %v1892, %v635
          %v1930 = vperm.slane %v1895, %v637
          %v1931 = vsel %vm639, %v1930, %v1929
          %v1932 = vperm.slane %v1898, %v641
          %v1933 = vsel %vm643, %v1932, %v1931
          %v1934 = vperm.slane %v1901, %v645
          %v1935 = vsel %vm647, %v1934, %v1933
          %v1936 = vperm.slane %v1904, %v649
          %v1937 = vsel %vm651, %v1936, %v1935
          %v1938 = vperm.slane %v1907, %v653
          %v1939 = vsel %vm655, %v1938, %v1937
          %v1940 = vperm.slane %v1910, %v657
          %v1941 = vsel %vm659, %v1940, %v1939
          %v1942 = vperm.slane %v1913, %v661
          %v1943 = vsel %vm663, %v1942, %v1941
          %v1944 = vsel %vm680, %v1943, %v1928
          %v1945 = vsel %vm682, %v1944, 0
          %1947 = vmatpush.msra.mxu0 0.0
          %1948 = vmatpush.msra.mxu0 0.0
          %1949 = vmatpush.msra.mxu0 0.0
          %1950 = vmatpush.msra.mxu0 0.0
          %1951 = vmatpush.msra.mxu0 0.0
          %1952 = vmatpush.msra.mxu0 0.0
          %1953 = vmatpush.msra.mxu0 0.0
          %1954 = vmatpush.msra.mxu0 0.0
          %1955 = vmatpush.msra.mxu0 %v1848
          %1956 = vmatpush.msra.mxu0 %v1847
          %1957 = vmatpush.msra.mxu0 %v1846
          %1958 = vmatpush.msra.mxu0 %v1845
          %1959 = vmatpush.msra.mxu0 %v1844
          %1960 = vmatpush.msra.mxu0 %v1843
          %1961 = vmatpush.msra.mxu0 %v1842
          %1962 = vmatpush.msra.mxu0 %v1841
          %1963 = vmatmul.f32.gmra.mxu0 %v1945
          %v1964 = vpop.f32.mrf.mxu0
          %v1965 = vadd.f32 %v1849, %v1964
          %1966 = vdwg.mxu0
          %v1967 = vmul.f32 %v1965, 0.70710677
          %v1968 = vand.u32 2147483647, %v1967
          %v1969 = vmul.f32 %v1968, 0.3275911
          %v1970 = vadd.f32 %v1969, 1.0
          %v1971 = vrcp.pop %v1970
          %v1972 = vmul.f32 %v1970, %v1971
          %v1973 = vsub.f32 1.0, %v1972
          %v1974 = vmul.f32 %v1971, %v1973
          %v1975 = vadd.f32 %v1971, %v1974
          %vm1976 = vweird.f32 %v1970
          %vm1977 = vweird.f32 %v1971
          %vm1978 = vmor %vm1976, %vm1977
          %v1979 = vsel %vm1978, %v1971, %v1975
          %v1980 = vand.u32 2147483647, %v1970
          %vm1981 = vcmp.eq.f32.partialorder %v1980, 8.507059e+37
          %v1982 = vand.u32 %v1970, 2147483648
          %v1983 = vor.u32 1.1754944e-38, %v1982
          %v1984 = vsel %vm1981, %v1983, %v1979
          %v1985 = vmul.f32 1.0, %v1984
          %v1986 = vmul.f32 %v1985, 1.0614054
          %v1987 = vadd.f32 %v1986, -1.4531521
          %v1988 = vmul.f32 %v1985, %v1987
          %v1989 = vadd.f32 %v1988, 1.4214138
          %v1990 = vmul.f32 %v1985, %v1989
          %v1991 = vadd.f32 %v1990, -0.28449672
          %v1992 = vmul.f32 %v1985, %v1991
          %v1993 = vadd.f32 %v1992, 0.2548296
          %v1994 = vmul.f32 %v1985, %v1993
          %v1995 = vsub.f32 0.0, %v1968
          %v1996 = vmul.f32 %v1995, %v1968
          %v1997 = vmul.f32 %v1996, 1.442695
          %v1998 = vpow.pop %v1997
          %v1999 = vmul.f32 %v1994, %v1998
          %v2000 = vsub.f32 1.0, %v1999
          %vm2001 = vcmp.ge.f32.partialorder %v1967, 0.0
          %v2002 = vsub.f32 0.0, %v2000
          %v2003 = vsel %vm2001, %v2000, %v2002
          %v2004 = vmul.f32 %v1965, 0.5
          %v2005 = vadd.f32 %v2003, 1.0
          %v2006 = vmul.f32 %v2004, %v2005
          %v2007 = vld [vmem:[%s4] sm:$0xff]
          %v2008 = vld [vmem:[%s4 + $0x8] sm:$0xff]
          %v2009 = vld [vmem:[%s4 + $0x10] sm:$0xff]
          %v2010 = vld [vmem:[%s4 + $0x18] sm:$0xff]
          %v2011 = vld [vmem:[%s4 + $0x20] sm:$0xff]
          %v2012 = vld [vmem:[%s4 + $0x28] sm:$0xff]
          %v2013 = vld [vmem:[%s4 + $0x30] sm:$0xff]
          %v2014 = vld [vmem:[%s4 + $0x38] sm:$0xff]
          %v2015 = vperm.slane %v595, 1
          %v2017 = vsel %vm682, %v2006, 0
          %2019 = vmatpush.msra.mxu0 0.0
          %2020 = vmatpush.msra.mxu0 0.0
          %2021 = vmatpush.msra.mxu0 0.0
          %2022 = vmatpush.msra.mxu0 0.0
          %2023 = vmatpush.msra.mxu0 0.0
          %2024 = vmatpush.msra.mxu0 0.0
          %2025 = vmatpush.msra.mxu0 0.0
          %2026 = vmatpush.msra.mxu0 0.0
          %2027 = vmatpush.msra.mxu0 %v2014
          %2028 = vmatpush.msra.mxu0 %v2013
          %2029 = vmatpush.msra.mxu0 %v2012
          %2030 = vmatpush.msra.mxu0 %v2011
          %2031 = vmatpush.msra.mxu0 %v2010
          %2032 = vmatpush.msra.mxu0 %v2009
          %2033 = vmatpush.msra.mxu0 %v2008
          %2034 = vmatpush.msra.mxu0 %v2007
          %2035 = vmatmul.f32.gmra.mxu0 %v2017
          %v2036 = vpop.f32.mrf.mxu0
          %v2037 = vadd.f32 %v2015, %v2036
          %2038 = vdwg.mxu0
          %v2039 = vmul.f32 %v2037, 0.70710677
          %v2040 = vand.u32 2147483647, %v2039
          %v2041 = vmul.f32 %v2040, 0.3275911
          %v2042 = vadd.f32 %v2041, 1.0
          %v2043 = vrcp.pop %v2042
          %v2044 = vmul.f32 %v2042, %v2043
          %v2045 = vsub.f32 1.0, %v2044
          %v2046 = vmul.f32 %v2043, %v2045
          %v2047 = vadd.f32 %v2043, %v2046
          %vm2048 = vweird.f32 %v2042
          %vm2049 = vweird.f32 %v2043
          %vm2050 = vmor %vm2048, %vm2049
          %v2051 = vsel %vm2050, %v2043, %v2047
          %v2052 = vand.u32 2147483647, %v2042
          %vm2053 = vcmp.eq.f32.partialorder %v2052, 8.507059e+37
          %v2054 = vand.u32 %v2042, 2147483648
          %v2055 = vor.u32 1.1754944e-38, %v2054
          %v2056 = vsel %vm2053, %v2055, %v2051
          %v2057 = vmul.f32 1.0, %v2056
          %v2058 = vmul.f32 %v2057, 1.0614054
          %v2059 = vadd.f32 %v2058, -1.4531521
          %v2060 = vmul.f32 %v2057, %v2059
          %v2061 = vadd.f32 %v2060, 1.4214138
          %v2062 = vmul.f32 %v2057, %v2061
          %v2063 = vadd.f32 %v2062, -0.28449672
          %v2064 = vmul.f32 %v2057, %v2063
          %v2065 = vadd.f32 %v2064, 0.2548296
          %v2066 = vmul.f32 %v2057, %v2065
          %v2067 = vsub.f32 0.0, %v2040
          %v2068 = vmul.f32 %v2067, %v2040
          %v2069 = vmul.f32 %v2068, 1.442695
          %v2070 = vpow.pop %v2069
          %v2071 = vmul.f32 %v2066, %v2070
          %v2072 = vsub.f32 1.0, %v2071
          %vm2073 = vcmp.ge.f32.partialorder %v2039, 0.0
          %v2074 = vsub.f32 0.0, %v2072
          %v2075 = vsel %vm2073, %v2072, %v2074
          %v2076 = vmul.f32 %v2037, 0.5
          %v2077 = vadd.f32 %v2075, 1.0
          %v2078 = vmul.f32 %v2076, %v2077
          %v2080 = vadd.f32 %v2078, %v1944
          %v2081 = vsel %vm1512, %v2080, 0.0
          %2082 = vadd.xlane.f32.xlu0 %v2081
          %v2083 = vpop.xlane.xlu0 %2082
          %v2084 = vmul.f32 %v2083, %v1522
          %v2085 = vsub.f32 %v2080, %v2084
          %v2086 = vmul.f32 %v2085, %v2085
          %v2087 = vsel %vm1512, %v2086, 0.0
          %2088 = vadd.xlane.f32.xlu0 %v2087
          %v2089 = vpop.xlane.xlu0 %2088
          %v2090 = vmul.f32 %v2089, %v1522
          %v2091 = vadd.f32 %v2090, 1e-05
          %v2092 = vrsqrt.pop %v2091
          %v2093 = vmul.f32 %v2092, %v2091
          %v2094 = vmul.f32 %v2093, %v2092
          %v2095 = vmul.f32 0.5, %v2094
          %v2096 = vsub.f32 1.5, %v2095
          %v2097 = vmul.f32 %v2092, %v2096
          %vm2098 = vweird.f32 %v2091
          %vm2099 = vweird.f32 %v2092
          %vm2100 = vmor %vm2098, %vm2099
          %v2101 = vsel %vm2100, %v2092, %v2097
          %v2102 = vmul.f32 %v2085, %v2101
          %v2103 = vmul.f32 %v2102, %v1693
          %v2104 = vadd.f32 %v2103, %v1767
          %v2105 = vsel %vm1512, %v2104, 0.0
          %v2106 = vrot.slane %v2105, 4
          %v2107 = vadd.f32 %v2105, %v2106
          %v2108 = vrot.slane %v2107, 2
          %v2109 = vadd.f32 %v2107, %v2108
          %v2110 = vrot.slane %v2109, 1
          %v2111 = vadd.f32 %v2109, %v2110
          %v2112 = vrcp.pop 2.0
          %v2113 = vmul.f32 2.0, %v2112
          %v2114 = vsub.f32 1.0, %v2113
          %v2115 = vmul.f32 %v2112, %v2114
          %v2116 = vadd.f32 %v2112, %v2115
          %vm2117 = vweird.f32 %v2112
          %v2118 = vsel %vm2117, %v2112, %v2116
          %v2119 = vmul.f32 %v2111, %v2118
          %vm2120 = vcmask 516096
          %2121 = vst.msk [vmem:[%s360] sm:$0x1] %vm2120, %v2119
        $region90: #{_encode_stacked.1} parent=77 // pred_fallthru
          _
        %s2122 = sand.u32 %s173, 1
        %s2123 = scalar_lea.sflag [#allocation5], %s2122
        %s2124 = sand.u32 %s173, 1
        %s2125 = scalar_lea.vmem [#allocation4], %s2124
        // Predicated region
        $region91: #{_encode_stacked.1} parent=77 // pred_check
          %p2126 = pneg %p183
        $region92: #{_encode_stacked.1} parent=77 // pred_check_branch
          %2128 = sbr.rel (%p2126) target = $region94
        $region93: #{_encode_stacked.1} parent=77 // pred_region
          %2130 = vsyncadd %s2123, 0
          %s2131 = scalar_lea.hbm %s6, %s24
          %s2133 = sshll.u32 %s2125, 4
          %s2134 = int_to_ptr.vmem [resolvable:$true] %s2133
          %s2135 = sshll.u32 %s2131, 4
          %s2136 = int_to_ptr.hbm [resolvable:$true] %s2135
          %2138 = dma.vmem_to_hbm [thread:$0]  %s2134, 16, %s2136, %s2123
        $region94: #{_encode_stacked.1} parent=77 // pred_fallthru
          _
      $region78: #{_encode_stacked.1} parent=5 // pred_fallthru
        _
      %p2139 = scmp.le.s32.totalorder 2, %s15
      // Predicated region
      $region95: #{_encode_stacked.1} parent=5 // pred_check
        %p2140 = pneg %p2139
      $region96: #{_encode_stacked.1} parent=5 // pred_check_branch
        %2142 = sbr.rel (%p2140) target = $region98
      $region97: #{_encode_stacked.1} parent=5 // pred_region
        %s2143 = ssub.s32 %s15, 2
        // Predicated region
        $region99: #{_encode_stacked.1} parent=97 // pred_check
          %p2144 = pneg %p189
        $region100: #{_encode_stacked.1} parent=97 // pred_check_branch
          %2146 = sbr.rel (%p2144) target = $region102
        $region101: #{_encode_stacked.1} parent=97 // pred_region
          %s2147 = sand.u32 %s174, 1
          %s2148 = scalar_lea.sflag [#allocation5], %s2147
          %s2149 = sand.u32 %s174, 1
          %s2150 = scalar_lea.vmem [#allocation4], %s2149
          %2152 = dma.done %s2148, 16
        $region102: #{_encode_stacked.1} parent=97 // pred_fallthru
          _
      $region98: #{_encode_stacked.1} parent=5 // pred_fallthru
        _
    $region6: #{_encode_stacked.1} parent=1 // loop_footer
      %s19 = sadd.s32 1, %s15
    $region7: #{_encode_stacked.1} parent=1 // loop_footer_branch
      %14 = sbr.rel target = $region3
    $region8: #{_encode_stacked.1} parent=1 // loop_exit
      _
    %2153 = vsyncpa [#allocation5], 1
    %s2154 = scalar_lea.sflag [#allocation5], 1
    %2155 = vsyncpa %s2154, 1

</llo_original>
